<compile_context>
chip_gen: v6e
topology: v6e:2x2x1
jax: 0.10.0
libtpu: 0.0.40
codegen_flags: <defaults>
</compile_context>

<pallas_src>
import jax
import jax.numpy as jnp
import numpy as np
from jax.experimental import pallas as pl
from jax.experimental.pallas import tpu as pltpu

LANE = 128
SUBLANE = 8


def _round_up(x, m):
    return ((x + m - 1) // m) * m


def _vmem_capacity_bytes():
    try:
        return int(pltpu.get_tpu_info().vmem_capacity_bytes)
    except Exception:
        return 64 << 20  # conservative (v7x per-core)


def _prefer_wide_mxu():
    """256-wide MXU generations (v6e / v7x)."""
    try:
        kind = jax.devices()[0].device_kind.lower()
    except Exception:
        return False
    return ("v6" in kind) or ("v7" in kind)


def _block_vmem_bytes(block_shape, dtype):
    """(sublane,128)-padded VMEM footprint of ONE buffer of a block."""
    itemsize = np.dtype(dtype).itemsize
    sub = 8 * max(1, 4 // itemsize)          # 8 for f32, 16 for bf16
    s = list(block_shape)
    while len(s) < 2:
        s = [1] + s
    minor = _round_up(int(s[-1]), LANE)
    second = _round_up(int(s[-2]), sub)
    rest = 1
    for d in s[:-2]:
        rest *= int(d)
    return rest * second * minor * itemsize


def _pick_tile_h(Ho, Wo, bytes_per_row, budget_bytes):
    """Largest tile_h <= Ho fitting the budget, preferring (tile_h*Wo) % 8 == 0."""
    cap = max(1, budget_bytes // max(1, bytes_per_row))
    th = min(Ho, cap)
    if th < Ho:
        while th > 1 and (th * Wo) % SUBLANE != 0:
            th -= 1
    return th


def _make_conv_stats_kernel(kh, stride, tile_h, Wo, Ho, Kpad, ct, ragged, y_dtype):
    """Conv (kh matmuls with K = kw*C_in) + per-tile BN partial statistics."""
    rows = tile_h * Wo

    def kernel(xs_ref, w_ref, y_ref, st_ref):
        # xs_ref : (1, stride, Hs, Wo, Kpad)  phase-split, W-folded input (resident per n)
        # w_ref  : (kh, Kpad, ct)             weight slab for this C_out tile
        # y_ref  : (1, tile_h, Wo, ct)        pre-BN conv output tile
        # st_ref : (1, 1, 2, ct)              row0 = tile sum, row1 = centered sumsq
        t = pl.program_id(2)
        t0 = pl.multiple_of(t * tile_h, tile_h)

        acc = jnp.zeros((rows, ct), jnp.float32)
        for i in range(kh):                   # static, unrolled: back-to-back MXU ops
            patch = xs_ref[0, i % stride, pl.ds(t0 + i // stride, tile_h), :, :]
            acc += jnp.dot(patch.reshape(rows, Kpad), w_ref[i],
                           preferred_element_type=jnp.float32)

        y_ref[...] = acc.reshape(1, tile_h, Wo, ct).astype(y_dtype)

        # numerically-stable per-tile stats (combined later via Chan's formula)
        if ragged:                            # last H tile may extend past Ho
            hloc = jax.lax.broadcasted_iota(jnp.int32, (rows, 1), 0) // Wo
            valid = (t0 + hloc) < Ho
            cnt = (jnp.minimum(Ho - t0, tile_h) * Wo).astype(jnp.float32)
            am = jnp.where(valid, acc, 0.0)
            tsum = jnp.sum(am, axis=0, keepdims=True)            # (1, ct)
            tmean = tsum / cnt
            d = jnp.where(valid, acc - tmean, 0.0)
        else:
            tsum = jnp.sum(acc, axis=0, keepdims=True)           # (1, ct)
            tmean = tsum * (1.0 / rows)
            d = acc - tmean
        tssq = jnp.sum(d * d, axis=0, keepdims=True)             # (1, ct)
        st_ref[...] = jnp.concatenate([tsum, tssq], axis=0).reshape(1, 1, 2, ct)

    return kernel


def _make_bn_act_kernel(apply_relu, ct):
    def kernel(y_ref, sc_ref, sh_ref, o_ref):
        v = y_ref[...].astype(jnp.float32)
        v = v * sc_ref[...].reshape(1, 1, 1, ct) + sh_ref[...].reshape(1, 1, 1, ct)
        if apply_relu:
            v = jnp.maximum(v, 0.0)
        o_ref[...] = v
    return kernel


def conv_bn_relu(x, weight, bias, gamma, beta, *, stride=1, padding=0,
                 act=False, act_before=False, eps=1e-5, y_dtype=jnp.bfloat16):
    """Forward of ConvBNReLULayer (separable=False), NCHW in / NCHW out.

    NOTE: the conv bias is dropped inside the kernel; this is exact only for
    training-mode BatchNorm (batch statistics), matching the reference module.
    """
    del bias
    N, C_in, H, W = x.shape
    C_out, C_in_w, kh, kw = weight.shape
    assert C_in_w == C_in

    Ho = (H + 2 * padding - kh) // stride + 1
    Wo = (W + 2 * padding - kw) // stride + 1
    Hp = H + 2 * padding

    # --- output-channel tiling: lane-dense only when C_out >= 128 ------------
    if C_out >= LANE:
        CT = 2 * LANE if (_prefer_wide_mxu() and C_out >= 2 * LANE) else LANE
        Cpo = _round_up(C_out, CT)
    else:
        CT = C_out
        Cpo = C_out
    n_c = Cpo // CT

    # --- contraction packing: fold kw*C_in, pad K to a sublane multiple ------
    Kc = kw * C_in
    Kpad = _round_up(Kc, SUBLANE)

    # --- spatial tiling (ragged last H tile allowed) --------------------------
    tile_h = _pick_tile_h(Ho, Wo, Wo * CT * 4, 4 << 20)
    n_t = (Ho + tile_h - 1) // tile_h
    ragged = (n_t * tile_h != Ho)
    Hs = n_t * tile_h + (kh - 1) // stride      # per-phase rows the kernel may read

    # --- one-time layout glue (fused XLA passes; no full im2col in HBM) -------
    x_nhwc = jnp.transpose(x, (0, 2, 3, 1)).astype(jnp.float32)
    if act and act_before:
        x_nhwc = jnp.maximum(x_nhwc, 0.0)
    xp = jnp.pad(x_nhwc, ((0, 0), (padding, padding), (padding, padding), (0, 0)))

    # Fold kw (and the W stride): xw[n,h,wo, j*C_in + c] = xp[n, h, wo*stride + j, c]
    cols = [xp[:, :, j:j + (Wo - 1) * stride + 1:stride, :] for j in range(kw)]
    xw = jnp.concatenate(cols, axis=-1) if kw > 1 else cols[0]
    if Kpad > Kc:
        xw = jnp.pad(xw, ((0, 0), (0, 0), (0, 0), (0, Kpad - Kc)))
    # Split H into stride phases so every in-kernel tap read is contiguous.
    targetH = stride * Hs
    if targetH > Hp:
        xw = jnp.pad(xw, ((0, 0), (0, targetH - Hp), (0, 0), (0, 0)))
    elif targetH < Hp:
        xw = xw[:, :targetH]
    xs = xw.reshape(N, Hs, stride, Wo, Kpad).transpose(0, 2, 1, 3, 4)

    # Weights: (C_out, C_in, kh, kw) -> (kh, kw*C_in, C_out), zero-padded.
    w_p = jnp.transpose(weight.astype(jnp.float32), (2, 3, 1, 0)).reshape(kh, Kc, C_out)
    w_p = jnp.pad(w_p, ((0, 0), (0, Kpad - Kc), (0, Cpo - C_out)))

    # --- VMEM budgets from padded block footprints ----------------------------
    cap = int(0.9 * _vmem_capacity_bytes())
    k1_need = 2 * (_block_vmem_bytes((1, stride, Hs, Wo, Kpad), jnp.float32)
                   + _block_vmem_bytes((kh, Kpad, CT), jnp.float32)
                   + _block_vmem_bytes((1, tile_h, Wo, CT), y_dtype)
                   + _block_vmem_bytes((1, 1, 2, CT), jnp.float32))
    vmem1 = int(min(cap, max(32 << 20, k1_need + (16 << 20))))

    # --- kernel 1: conv (K-folded tap loop) + per-tile BN partial stats -------
    # grid = (N, n_c, n_t): weight slab is fetched once per (n, c); the
    # phase-split input block is constant across (c, t) so it is DMA'd once per n.
    conv_kernel = _make_conv_stats_kernel(kh, stride, tile_h, Wo, Ho, Kpad, CT,
                                          ragged, y_dtype)
    y, stats = pl.pallas_call(
        conv_kernel,
        grid=(N, n_c, n_t),
        in_specs=[
            pl.BlockSpec((1, stride, Hs, Wo, Kpad), lambda n, c, t: (n, 0, 0, 0, 0)),
            pl.BlockSpec((kh, Kpad, CT), lambda n, c, t: (0, 0, c)),
        ],
        out_specs=[
            pl.BlockSpec((1, tile_h, Wo, CT), lambda n, c, t: (n, t, 0, c)),
            pl.BlockSpec((1, 1, 2, CT), lambda n, c, t: (n, t, 0, c)),
        ],
        out_shape=[
            jax.ShapeDtypeStruct((N, Ho, Wo, Cpo), y_dtype),
            jax.ShapeDtypeStruct((N, n_t, 2, Cpo), jnp.float32),
        ],
        compiler_params=pltpu.CompilerParams(
            dimension_semantics=("parallel", "parallel", "parallel"),
            vmem_limit_bytes=vmem1),
    )(xs, w_p)

    # --- tiny scalar glue: Chan-combine per-tile stats, fold BN into scale/shift
    row_counts = (np.minimum(tile_h, Ho - tile_h * np.arange(n_t)) * Wo).astype(np.float32)
    cnt = jnp.asarray(row_counts).reshape(1, n_t, 1)
    M = float(N * Ho * Wo)
    tsum = stats[:, :, 0, :]                                   # (N, n_t, Cpo)
    tssq = stats[:, :, 1, :]
    mean = jnp.sum(tsum, axis=(0, 1)) / M                      # (Cpo,)
    tmean = tsum / cnt
    var = (jnp.sum(tssq, axis=(0, 1))
           + jnp.sum(cnt * (tmean - mean) ** 2, axis=(0, 1))) / M    # biased var
    var = jnp.maximum(var, 0.0)
    inv = jax.lax.rsqrt(var + eps)
    gamma_p = jnp.pad(gamma.astype(jnp.float32).reshape(-1), (0, Cpo - C_out))
    beta_p = jnp.pad(beta.astype(jnp.float32).reshape(-1), (0, Cpo - C_out))
    scale = (gamma_p * inv).reshape(1, Cpo)
    shift = (beta_p - mean * gamma_p * inv).reshape(1, Cpo)

    # --- kernel 2: normalize + affine + optional ReLU (big mem-bound blocks) --
    tile_h2 = _pick_tile_h(Ho, Wo, Wo * CT * (4 + np.dtype(y_dtype).itemsize), 8 << 20)
    n_t2 = (Ho + tile_h2 - 1) // tile_h2
    k2_need = 2 * (_block_vmem_bytes((1, tile_h2, Wo, CT), y_dtype)
                   + _block_vmem_bytes((1, tile_h2, Wo, CT), jnp.float32)
                   + 2 * _block_vmem_bytes((1, CT), jnp.float32))
    vmem2 = int(min(cap, max(32 << 20, k2_need + (16 << 20))))

    bn_kernel = _make_bn_act_kernel(act and not act_before, CT)
    out_nhwc = pl.pallas_call(
        bn_kernel,
        grid=(N, n_c, n_t2),
        in_specs=[pl.BlockSpec((1, tile_h2, Wo, CT), lambda n, c, t: (n, t, 0, c)),
                  pl.BlockSpec((1, CT), lambda n, c, t: (0, c)),
                  pl.BlockSpec((1, CT), lambda n, c, t: (0, c))],
        out_specs=pl.BlockSpec((1, tile_h2, Wo, CT), lambda n, c, t: (n, t, 0, c)),
        out_shape=jax.ShapeDtypeStruct((N, Ho, Wo, Cpo), jnp.float32),
        compiler_params=pltpu.CompilerParams(
            dimension_semantics=("parallel", "parallel", "parallel"),
            vmem_limit_bytes=vmem2),
    )(y, scale, shift)

    out = out_nhwc if Cpo == C_out else out_nhwc[..., :C_out]
    return jnp.transpose(out, (0, 3, 1, 2))   # back to the module's NCHW contract


def _reference(x, weight, bias, gamma, beta, *, stride, padding, act, act_before, eps=1e-5):
    if act and act_before:
        x = jnp.maximum(x, 0.0)
    y = jax.lax.conv_general_dilated(
        x, weight, (stride, stride), [(padding, padding), (padding, padding)],
        dimension_numbers=('NCHW', 'OIHW', 'NCHW'))
    y = y + bias.reshape(1, -1, 1, 1)
    mean = y.mean(axis=(0, 2, 3), keepdims=True)
    var = y.var(axis=(0, 2, 3), keepdims=True)          # biased, BN training mode
    y = (y - mean) / jnp.sqrt(var + eps) * gamma.reshape(1, -1, 1, 1) + beta.reshape(1, -1, 1, 1)
    if act and not act_before:
        y = jnp.maximum(y, 0.0)
    return y


if __name__ == "__main__":
    key = jax.random.PRNGKey(0)
    kx, kw_, kb, kg, kbeta = jax.random.split(key, 5)

    def run_case(in_ch, out_ch, ksize, pad, stride, act, act_before, y_dtype, rtol, atol):
        x = jax.random.normal(kx, (2, in_ch, 16, 16), dtype=jnp.float32)
        weight = jax.random.normal(kw_, (out_ch, in_ch, ksize, ksize), dtype=jnp.float32) * 0.1
        bias = jax.random.normal(kb, (out_ch,), dtype=jnp.float32) * 0.1
        gamma = 1.0 + 0.1 * jax.random.normal(kg, (out_ch,), dtype=jnp.float32)
        beta = 0.1 * jax.random.normal(kbeta, (out_ch,), dtype=jnp.float32)

        out = conv_bn_relu(x, weight, bias, gamma, beta, stride=stride, padding=pad,
                           act=act, act_before=act_before, y_dtype=y_dtype)
        out = jax.block_until_ready(out)
        ref = _reference(x, weight, bias, gamma, beta, stride=stride, padding=pad,
                         act=act, act_before=act_before)
        ref = jax.block_until_ready(ref)
        assert out.shape == ref.shape, (out.shape, ref.shape)
        np.testing.assert_allclose(np.asarray(out), np.asarray(ref), rtol=rtol, atol=atol)

    # ConvBNReLULayer(4, 8, kernel_size=3, padding=1, stride=1, act=True) — f32 path, tight.
    run_case(4, 8, 3, 1, 1, True, False, jnp.float32, 1e-4, 1e-4)
    # Same layer with the bf16 intermediate y (halved conv->BN HBM traffic).
    run_case(4, 8, 3, 1, 1, True, False, jnp.bfloat16, 5e-2, 5e-2)
    # Stride-2, act_before variant — exercises the stride-phase-split path.
    run_case(4, 8, 3, 1, 2, True, True, jnp.float32, 1e-4, 1e-4)

    print("KERNEL_OK")
</pallas_src>

<mosaic_0001>
module attributes {stable_mosaic.version = 11 : i64} {
  func.func @kernel(%arg0: i32, %arg1: i32, %arg2: i32, %arg3: memref<1x1x18x16x16xf32, #tpu.memory_space<vmem>>, %arg4: memref<3x16x8xf32, #tpu.memory_space<vmem>>, %arg5: memref<1x16x16x8xf32, #tpu.memory_space<vmem>>, %arg6: memref<1x1x2x8xf32, #tpu.memory_space<vmem>>) attributes {dimension_semantics = [#tpu.dimension_semantics<parallel>, #tpu.dimension_semantics<parallel>, #tpu.dimension_semantics<parallel>], iteration_bounds = array<i64: 2, 1, 1>, scalar_prefetch = 0 : i64, scratch_operands = 0 : i64, tpu.core_type = #tpu.core_type<tc>, window_params = [{transform_indices = @transform_0, window_bounds = array<i64: 1, 1, 18, 16, 16>}, {transform_indices = @transform_1, window_bounds = array<i64: 3, 16, 8>}, {transform_indices = @transform_2, window_bounds = array<i64: 1, 16, 16, 8>}, {transform_indices = @transform_3, window_bounds = array<i64: 1, 1, 2, 8>}]} {
    %c16_i32 = arith.constant 16 : i32
    %0 = arith.muli %arg2, %c16_i32 : i32
    %1 = tpu.assume_multiple %0, 16 : i32
    %cst = arith.constant 0.000000e+00 : f32
    %2 = vector.broadcast %cst : f32 to vector<256x8xf32>
    %c0_i32 = arith.constant 0 : i32
    %3 = arith.addi %1, %c0_i32 : i32
    %c0 = arith.constant 0 : index
    %c0_0 = arith.constant 0 : index
    %4 = arith.index_cast %3 : i32 to index
    %c0_1 = arith.constant 0 : index
    %c0_2 = arith.constant 0 : index
    %5 = vector.load %arg3[%c0, %c0_0, %4, %c0_1, %c0_2] : memref<1x1x18x16x16xf32, #tpu.memory_space<vmem>>, vector<1x1x16x16x16xf32>
    %6 = vector.shape_cast %5 : vector<1x1x16x16x16xf32> to vector<16x16x16xf32>
    %7 = vector.shape_cast %6 : vector<16x16x16xf32> to vector<256x16xf32>
    %c0_3 = arith.constant 0 : index
    %c0_4 = arith.constant 0 : index
    %c0_5 = arith.constant 0 : index
    %8 = vector.load %arg4[%c0_3, %c0_4, %c0_5] : memref<3x16x8xf32, #tpu.memory_space<vmem>>, vector<1x16x8xf32>
    %9 = vector.shape_cast %8 : vector<1x16x8xf32> to vector<16x8xf32>
    %cst_6 = arith.constant dense<0.000000e+00> : vector<256x8xf32>
    %10 = tpu.matmul %7, %9, %cst_6 {dimension_numbers = #tpu.dot_dimension_numbers<[1], [0], [0], [1], [0, 0, 1, 1], [], []>} : vector<256x16xf32>, vector<16x8xf32>, vector<256x8xf32> -> vector<256x8xf32>
    %11 = arith.addf %2, %10 : vector<256x8xf32>
    %c1_i32 = arith.constant 1 : i32
    %12 = arith.addi %1, %c1_i32 : i32
    %c0_7 = arith.constant 0 : index
    %c0_8 = arith.constant 0 : index
    %13 = arith.index_cast %12 : i32 to index
    %c0_9 = arith.constant 0 : index
    %c0_10 = arith.constant 0 : index
    %14 = vector.load %arg3[%c0_7, %c0_8, %13, %c0_9, %c0_10] : memref<1x1x18x16x16xf32, #tpu.memory_space<vmem>>, vector<1x1x16x16x16xf32>
    %15 = vector.shape_cast %14 : vector<1x1x16x16x16xf32> to vector<16x16x16xf32>
    %16 = vector.shape_cast %15 : vector<16x16x16xf32> to vector<256x16xf32>
    %c1 = arith.constant 1 : index
    %c0_11 = arith.constant 0 : index
    %c0_12 = arith.constant 0 : index
    %17 = vector.load %arg4[%c1, %c0_11, %c0_12] : memref<3x16x8xf32, #tpu.memory_space<vmem>>, vector<1x16x8xf32>
    %18 = vector.shape_cast %17 : vector<1x16x8xf32> to vector<16x8xf32>
    %cst_13 = arith.constant dense<0.000000e+00> : vector<256x8xf32>
    %19 = tpu.matmul %16, %18, %cst_13 {dimension_numbers = #tpu.dot_dimension_numbers<[1], [0], [0], [1], [0, 0, 1, 1], [], []>} : vector<256x16xf32>, vector<16x8xf32>, vector<256x8xf32> -> vector<256x8xf32>
    %20 = arith.addf %11, %19 : vector<256x8xf32>
    %c2_i32 = arith.constant 2 : i32
    %21 = arith.addi %1, %c2_i32 : i32
    %c0_14 = arith.constant 0 : index
    %c0_15 = arith.constant 0 : index
    %22 = arith.index_cast %21 : i32 to index
    %c0_16 = arith.constant 0 : index
    %c0_17 = arith.constant 0 : index
    %23 = vector.load %arg3[%c0_14, %c0_15, %22, %c0_16, %c0_17] : memref<1x1x18x16x16xf32, #tpu.memory_space<vmem>>, vector<1x1x16x16x16xf32>
    %24 = vector.shape_cast %23 : vector<1x1x16x16x16xf32> to vector<16x16x16xf32>
    %25 = vector.shape_cast %24 : vector<16x16x16xf32> to vector<256x16xf32>
    %c2 = arith.constant 2 : index
    %c0_18 = arith.constant 0 : index
    %c0_19 = arith.constant 0 : index
    %26 = vector.load %arg4[%c2, %c0_18, %c0_19] : memref<3x16x8xf32, #tpu.memory_space<vmem>>, vector<1x16x8xf32>
    %27 = vector.shape_cast %26 : vector<1x16x8xf32> to vector<16x8xf32>
    %cst_20 = arith.constant dense<0.000000e+00> : vector<256x8xf32>
    %28 = tpu.matmul %25, %27, %cst_20 {dimension_numbers = #tpu.dot_dimension_numbers<[1], [0], [0], [1], [0, 0, 1, 1], [], []>} : vector<256x16xf32>, vector<16x8xf32>, vector<256x8xf32> -> vector<256x8xf32>
    %29 = arith.addf %20, %28 : vector<256x8xf32>
    %30 = vector.shape_cast %29 : vector<256x8xf32> to vector<1x16x16x8xf32>
    %c0_21 = arith.constant 0 : index
    %c0_22 = arith.constant 0 : index
    %c0_23 = arith.constant 0 : index
    %c0_24 = arith.constant 0 : index
    %31 = vector.load %arg5[%c0_21, %c0_22, %c0_23, %c0_24] : memref<1x16x16x8xf32, #tpu.memory_space<vmem>>, vector<1x16x16x8xf32>
    tpu.vector_store %arg5[%c0_21, %c0_22, %c0_23, %c0_24], %30 {strides = array<i32>} : memref<1x16x16x8xf32, #tpu.memory_space<vmem>>, vector<1x16x16x8xf32>,
    %cst_25 = arith.constant dense<0.000000e+00> : vector<8xf32>
    %32 = vector.multi_reduction <add>, %29, %cst_25 [0] : vector<256x8xf32> to vector<8xf32>
    %33 = vector.shape_cast %32 : vector<8xf32> to vector<1x8xf32>
    %cst_26 = arith.constant 3.906250e-03 : f32
    %34 = vector.broadcast %cst_26 : f32 to vector<1x8xf32>
    %35 = arith.mulf %33, %34 : vector<1x8xf32>
    %36 = vector.broadcast %35 : vector<1x8xf32> to vector<256x8xf32>
    %37 = arith.subf %29, %36 : vector<256x8xf32>
    %38 = arith.mulf %37, %37 : vector<256x8xf32>
    %cst_27 = arith.constant dense<0.000000e+00> : vector<8xf32>
    %39 = vector.multi_reduction <add>, %38, %cst_27 [0] : vector<256x8xf32> to vector<8xf32>
    %40 = vector.shape_cast %39 : vector<8xf32> to vector<1x8xf32>
    %41 = tpu.concatenate %33, %40 in 0 : vector<1x8xf32>, vector<1x8xf32> -> vector<2x8xf32>
    %42 = vector.shape_cast %41 : vector<2x8xf32> to vector<1x1x2x8xf32>
    %c0_28 = arith.constant 0 : index
    %c0_29 = arith.constant 0 : index
    %c0_30 = arith.constant 0 : index
    %c0_31 = arith.constant 0 : index
    %43 = vector.load %arg6[%c0_28, %c0_29, %c0_30, %c0_31] : memref<1x1x2x8xf32, #tpu.memory_space<vmem>>, vector<1x1x2x8xf32>
    tpu.vector_store %arg6[%c0_28, %c0_29, %c0_30, %c0_31], %42 {strides = array<i32>} : memref<1x1x2x8xf32, #tpu.memory_space<vmem>>, vector<1x1x2x8xf32>,
    return
  }
  func.func @transform_0(%arg0: i32, %arg1: i32, %arg2: i32) -> (i32, i32, i32, i32, i32) {
    %c0_i32 = arith.constant 0 : i32
    %c0_i32_0 = arith.constant 0 : i32
    %c0_i32_1 = arith.constant 0 : i32
    %c0_i32_2 = arith.constant 0 : i32
    %c0_i32_3 = arith.constant 0 : i32
    return %arg0, %c0_i32, %c0_i32_0, %c0_i32_1, %c0_i32_2 : i32, i32, i32, i32, i32
  }
  func.func @transform_1(%arg0: i32, %arg1: i32, %arg2: i32) -> (i32, i32, i32) {
    %c0_i32 = arith.constant 0 : i32
    %c0_i32_0 = arith.constant 0 : i32
    %c0_i32_1 = arith.constant 0 : i32
    return %c0_i32, %c0_i32_0, %arg1 : i32, i32, i32
  }
  func.func @transform_2(%arg0: i32, %arg1: i32, %arg2: i32) -> (i32, i32, i32, i32) {
    %c0_i32 = arith.constant 0 : i32
    %c0_i32_0 = arith.constant 0 : i32
    return %arg0, %arg2, %c0_i32, %arg1 : i32, i32, i32, i32
  }
  func.func @transform_3(%arg0: i32, %arg1: i32, %arg2: i32) -> (i32, i32, i32, i32) {
    %c0_i32 = arith.constant 0 : i32
    %c0_i32_0 = arith.constant 0 : i32
    return %arg0, %arg2, %c0_i32, %arg1 : i32, i32, i32, i32
  }
}

</mosaic_0001>

<llo_original>
// kernel: tpu_custom_call.1
$region0: #{tpu_custom_call.1}
  #allocation0 [shape = 'u32[]', space=smem, size = 0x4, offset = 0x4, fixed_abs, tag = 'smem constant byte address 0x4 - core index']
  #allocation1 [shape = 'u32[144,128]{1,0:T(1,128)}', space=vmem, size = 0x12000, scoped, tag = 'internal scratch']
  %s0 = inlined_call_operand.vmem [shape: f32[2,1,18,16,16], index: 0, kind: input, shape index: {}]
  %s1 = inlined_call_operand.vmem [shape: f32[3,16,8], index: 1, kind: input, shape index: {}]
  %s2 = inlined_call_operand.vmem [shape: f32[2,16,16,8], index: 2, kind: output, shape index: {0}]
  %s3 = inlined_call_operand.hbm [shape: f32[2,1,2,8], index: 3, kind: output, shape index: {1}]
  %4 = xla_tuple %s2, %s3
  %s5 = sld [smem:[#allocation0]]
  $region49: #{tpu_custom_call.1} parent=0
    _
  %s7 = ssub.s32 1, %s5
  %s8 = scalar_select 0, %s7, %s5
  $region1: #{tpu_custom_call.1} parent=0
    #allocation2 [shape = 'u8[2048]{0}', space=vmem, size = 0x800, scoped, tag = 'output window, operand 1']
    #allocation3 [shape = 's32[2]{0}', space=sflag, size = 0x8, scoped, tag = 'scoped memory for tpu_custom_call.1']
    %9 = vsyncpa [#allocation3], 0
    %s10 = scalar_lea.sflag [#allocation3], 1
    %11 = vsyncpa %s10, 0
    loop: start=0, step=1, limit=4
    $region2: #{tpu_custom_call.1} parent=1 // loop_pre_header
      _
    $region3: #{tpu_custom_call.1} parent=1 // loop_header
      %s13 = sphi 0, %s17
      %p14 = scmp.ge.s32.totalorder %s13, 4
      %s20 = sphi 0, %s39
      %s21 = sphi 0, %s35
      %s22 = sphi 0, %s31
      %s23 = sphi 0, %s20
      %s24 = sphi 0, %s21
      %s25 = sphi 0, %s22
      %s26 = sphi 0, %s23
      %s27 = sphi 0, %s24
      %s28 = sphi 0, %s25
      %s42 = sphi 0, %s44
      %s45 = sphi 0, %s42
      %s46 = sphi 0, %s45
      %s62 = sphi 0, %s46
      %s68 = sphi 0, %s70
      %s71 = sphi 0, %s68
      %s72 = sphi 0, %s71
      %s88 = sphi 0, %s72
      %s98 = sphi 0, %s100
      %s101 = sphi 0, %s98
      %s102 = sphi 0, %s101
      %s118 = sphi 0, %s102
      %s128 = sphi 0, %s130
      %s131 = sphi 0, %s128
      %s132 = sphi 0, %s131
      %s148 = sphi 0, %s132
    $region4: #{tpu_custom_call.1} parent=1 // loop_header_branch
      %16 = sbr.rel (%p14) target = $region8
    $region5: #{tpu_custom_call.1} parent=1 // loop_body
      %s18 = ssub.s32 %s13, 1
      %s19 = ssub.s32 %s13, 2
      %s29 = sadd.s32 1, %s22
      %p30 = scmp.ge.s32.totalorder %s29, 1
      %s31 = scalar_select %p30, 0, %s29
      %s32 = sadd.s32 1, %s21
      %s33 = scalar_select %p30, %s32, %s21
      %p34 = scmp.ge.s32.totalorder %s33, 1
      %s35 = scalar_select %p34, 0, %s33
      %s36 = sadd.s32 1, %s20
      %s37 = scalar_select %p34, %s36, %s20
      %p38 = scmp.ge.s32.totalorder %s37, 2
      %s39 = scalar_select %p38, 0, %s37
      %s40 = ssub.s32 %s20, %s39
      %p41 = scmp.eq.s32.totalorder %s40, 0
      %s43 = sadd.s32 %s42, 1
      %s44 = scalar_select %p41, %s42, %s43
      %p47 = pneg %p41
      %p48 = scmp.eq.s32.totalorder %s13, 1
      %p49 = por %p47, %p48
      %p50 = scmp.ne.s32.totalorder %s42, %s45
      %p51 = scmp.eq.s32.totalorder %s13, 0
      %p52 = por %p50, %p51
      %p53 = scmp.ne.s32.totalorder %s42, %s45
      %p54 = scmp.eq.s32.totalorder %s18, 1
      %p55 = por %p53, %p54
      %p56 = scmp.ne.s32.totalorder %s45, %s46
      %p57 = scmp.eq.s32.totalorder %s18, 0
      %p58 = por %p56, %p57
      %p59 = scmp.ne.s32.totalorder %s45, %s46
      %p60 = scmp.eq.s32.totalorder %s19, 1
      %p61 = por %p59, %p60
      %p63 = scmp.ne.s32.totalorder %s46, %s62
      %p64 = scmp.eq.s32.totalorder %s19, 0
      %p65 = por %p63, %p64
      %s66 = ssub.s32 %s21, %s35
      %p67 = scmp.eq.s32.totalorder %s66, 0
      %s69 = sadd.s32 %s68, 1
      %s70 = scalar_select %p67, %s68, %s69
      %p73 = pneg %p67
      %p74 = scmp.eq.s32.totalorder %s13, 1
      %p75 = por %p73, %p74
      %p76 = scmp.ne.s32.totalorder %s68, %s71
      %p77 = scmp.eq.s32.totalorder %s13, 0
      %p78 = por %p76, %p77
      %p79 = scmp.ne.s32.totalorder %s68, %s71
      %p80 = scmp.eq.s32.totalorder %s18, 1
      %p81 = por %p79, %p80
      %p82 = scmp.ne.s32.totalorder %s71, %s72
      %p83 = scmp.eq.s32.totalorder %s18, 0
      %p84 = por %p82, %p83
      %p85 = scmp.ne.s32.totalorder %s71, %s72
      %p86 = scmp.eq.s32.totalorder %s19, 1
      %p87 = por %p85, %p86
      %p89 = scmp.ne.s32.totalorder %s72, %s88
      %p90 = scmp.eq.s32.totalorder %s19, 0
      %p91 = por %p89, %p90
      %s92 = ssub.s32 %s20, %s39
      %s93 = ssub.s32 %s22, %s31
      %s94 = sor.u32 %s92, %s93
      %s95 = ssub.s32 %s21, %s35
      %s96 = sor.u32 %s94, %s95
      %p97 = scmp.eq.s32.totalorder %s96, 0
      %s99 = sadd.s32 %s98, 1
      %s100 = scalar_select %p97, %s98, %s99
      %p103 = pneg %p97
      %p104 = scmp.eq.s32.totalorder %s13, 1
      %p105 = por %p103, %p104
      %p106 = scmp.ne.s32.totalorder %s98, %s101
      %p107 = scmp.eq.s32.totalorder %s13, 0
      %p108 = por %p106, %p107
      %p109 = scmp.ne.s32.totalorder %s98, %s101
      %p110 = scmp.eq.s32.totalorder %s18, 1
      %p111 = por %p109, %p110
      %p112 = scmp.ne.s32.totalorder %s101, %s102
      %p113 = scmp.eq.s32.totalorder %s18, 0
      %p114 = por %p112, %p113
      %p115 = scmp.ne.s32.totalorder %s101, %s102
      %p116 = scmp.eq.s32.totalorder %s19, 1
      %p117 = por %p115, %p116
      %p119 = scmp.ne.s32.totalorder %s102, %s118
      %p120 = scmp.eq.s32.totalorder %s19, 0
      %p121 = por %p119, %p120
      %s122 = ssub.s32 %s20, %s39
      %s123 = ssub.s32 %s22, %s31
      %s124 = sor.u32 %s122, %s123
      %s125 = ssub.s32 %s21, %s35
      %s126 = sor.u32 %s124, %s125
      %p127 = scmp.eq.s32.totalorder %s126, 0
      %s129 = sadd.s32 %s128, 1
      %s130 = scalar_select %p127, %s128, %s129
      %p133 = pneg %p127
      %p134 = scmp.eq.s32.totalorder %s13, 1
      %p135 = por %p133, %p134
      %p136 = scmp.ne.s32.totalorder %s128, %s131
      %p137 = scmp.eq.s32.totalorder %s13, 0
      %p138 = por %p136, %p137
      %p139 = scmp.ne.s32.totalorder %s128, %s131
      %p140 = scmp.eq.s32.totalorder %s18, 1
      %p141 = por %p139, %p140
      %p142 = scmp.ne.s32.totalorder %s131, %s132
      %p143 = scmp.eq.s32.totalorder %s18, 0
      %p144 = por %p142, %p143
      %p145 = scmp.ne.s32.totalorder %s131, %s132
      %p146 = scmp.eq.s32.totalorder %s19, 1
      %p147 = por %p145, %p146
      %p149 = scmp.ne.s32.totalorder %s132, %s148
      %p150 = scmp.eq.s32.totalorder %s19, 0
      %p151 = por %p149, %p150
      %p152 = scmp.le.s32.totalorder 1, %s13
      %p153 = scmp.lt.s32.totalorder %s13, 3
      %p154 = pnand %p152, %p153
      %p155 = pneg %p154
      // Predicated region
      $region9: #{tpu_custom_call.1} parent=5 // pred_check
        _
      $region10: #{tpu_custom_call.1} parent=5 // pred_check_branch
        %157 = sbr.rel (%p154) target = $region12
      $region11: #{tpu_custom_call.1} parent=5 // pred_region
        %s158 = ssub.s32 %s13, 1
        // Predicated region
        $region13: #{tpu_custom_call.1} parent=11 // pred_check
          %p159 = pneg %p84
        $region14: #{tpu_custom_call.1} parent=11 // pred_check_branch
          %161 = sbr.rel (%p159) target = $region16
        $region15: #{tpu_custom_call.1} parent=11 // pred_region
          %p162 = scmp.lt.s32.totalorder %s24, 0
          %s163 = scalar_select %p162, %s24, 0
          %s164 = smul.addr %s163, 8
          %s165 = scalar_lea.vmem %s1, %s164
        $region16: #{tpu_custom_call.1} parent=11 // pred_fallthru
          _
      $region12: #{tpu_custom_call.1} parent=5 // pred_fallthru
        _
      %p166 = scmp.lt.s32.totalorder %s13, 2
      // Predicated region
      $region17: #{tpu_custom_call.1} parent=5 // pred_check
        %p167 = pneg %p166
      $region18: #{tpu_custom_call.1} parent=5 // pred_check_branch
        %169 = sbr.rel (%p167) target = $region20
      $region19: #{tpu_custom_call.1} parent=5 // pred_region
        // Predicated region
        $region21: #{tpu_custom_call.1} parent=19 // pred_check
          %p170 = pneg %p52
        $region22: #{tpu_custom_call.1} parent=19 // pred_check_branch
          %172 = sbr.rel (%p170) target = $region24
        $region23: #{tpu_custom_call.1} parent=19 // pred_region
          %p173 = scmp.lt.s32.totalorder %s20, 1
          %s174 = scalar_select %p173, %s20, 1
          %s175 = smul.addr %s174, 36
          %s176 = smul.addr %s175, 8
          %s177 = scalar_lea.vmem %s0, %s176
        $region24: #{tpu_custom_call.1} parent=19 // pred_fallthru
          _
      $region20: #{tpu_custom_call.1} parent=5 // pred_fallthru
        _
      %p178 = scmp.le.s32.totalorder 1, %s13
      %p179 = scmp.lt.s32.totalorder %s13, 3
      %p180 = pnand %p178, %p179
      %p181 = pneg %p180
      // Predicated region
      $region25: #{tpu_custom_call.1} parent=5 // pred_check
        _
      $region26: #{tpu_custom_call.1} parent=5 // pred_check_branch
        %183 = sbr.rel (%p180) target = $region28
      $region27: #{tpu_custom_call.1} parent=5 // pred_region
        %s184 = ssub.s32 %s13, 1
        %p185 = scmp.lt.s32.totalorder %s23, 1
        %s186 = scalar_select %p185, %s23, 1
        %s187 = smul.addr %s186, 36
        %s188 = smul.addr %s187, 8
        %s189 = scalar_lea.vmem %s0, %s188
        %p190 = pneg %p58
        %p191 = pneg %p55
        %p192 = scmp.lt.s32.totalorder %s24, 0
        %s193 = scalar_select %p192, %s24, 0
        %s194 = smul.addr %s193, 8
        %s195 = scalar_lea.vmem %s1, %s194
        %p196 = pneg %p84
        %p197 = pneg %p81
        %p198 = pneg %p114
        %p199 = pneg %p111
        %s200 = smul.u32 16, %s25
        %p201 = scmp.lt.s32.totalorder %s23, 1
        %s202 = scalar_select %p201, %s23, 1
        %p203 = scmp.lt.s32.totalorder %s200, 15
        %s204 = scalar_select %p203, %s200, 15
        %p205 = scmp.lt.s32.totalorder %s24, 0
        %s206 = scalar_select %p205, %s24, 0
        %s207 = smul.addr %s204, 2
        %s208 = sadd.s32 %s206, %s207
        %s209 = smul.addr %s202, 32
        %s210 = sadd.s32 %s208, %s209
        %s211 = smul.addr %s210, 8
        %s212 = scalar_lea.vmem %s2, %s211
        %p213 = pneg %p144
        %p214 = pneg %p141
        %s215 = sand.u32 %s131, 1
        %s216 = scalar_lea.sflag [#allocation3], %s215
        %s217 = sand.u32 %s131, 1
        %s218 = smul.addr %s217, 2
        %s219 = scalar_lea.vmem [#allocation2], %s218
        %p220 = scmp.lt.s32.totalorder %s23, 1
        %s221 = scalar_select %p220, %s23, 1
        %s222 = smul.addr %s221, 36
        %s223 = smul.addr %s222, 8
        %s224 = scalar_lea.vmem %s0, %s223
        %p225 = scmp.lt.s32.totalorder %s24, 0
        %s226 = scalar_select %p225, %s24, 0
        %s227 = smul.addr %s226, 8
        %s228 = scalar_lea.vmem %s1, %s227
        %s229 = smul.u32 16, %s25
        %p230 = scmp.lt.s32.totalorder %s23, 1
        %s231 = scalar_select %p230, %s23, 1
        %p232 = scmp.lt.s32.totalorder %s229, 15
        %s233 = scalar_select %p232, %s229, 15
        %p234 = scmp.lt.s32.totalorder %s24, 0
        %s235 = scalar_select %p234, %s24, 0
        %s236 = smul.addr %s233, 2
        %s237 = sadd.s32 %s235, %s236
        %s238 = smul.addr %s231, 32
        %s239 = sadd.s32 %s237, %s238
        %s240 = smul.addr %s239, 8
        %s241 = scalar_lea.vmem %s2, %s240
        %s242 = smul.u32 16, %s25
        %s243 = smul.u32 %s25, 16
        %s244 = smul.u32 %s243, 16
        %s245 = scalar_lea.vmem %s224, %s244
        %v246 = vld [vmem:[%s245] sm:$0xff]
        %v247 = vld [vmem:[%s245 + $0x8] sm:$0xff]
        %v248 = vld [vmem:[%s245 + $0x10] sm:$0xff]
        %v249 = vld [vmem:[%s245 + $0x18] sm:$0xff]
        %v250 = vld [vmem:[%s245 + $0x20] sm:$0xff]
        %v251 = vld [vmem:[%s245 + $0x28] sm:$0xff]
        %v252 = vld [vmem:[%s245 + $0x30] sm:$0xff]
        %v253 = vld [vmem:[%s245 + $0x38] sm:$0xff]
        %v254 = vld [vmem:[%s245 + $0x40] sm:$0xff]
        %v255 = vld [vmem:[%s245 + $0x48] sm:$0xff]
        %v256 = vld [vmem:[%s245 + $0x50] sm:$0xff]
        %v257 = vld [vmem:[%s245 + $0x58] sm:$0xff]
        %v258 = vld [vmem:[%s245 + $0x60] sm:$0xff]
        %v259 = vld [vmem:[%s245 + $0x68] sm:$0xff]
        %v260 = vld [vmem:[%s245 + $0x70] sm:$0xff]
        %v261 = vld [vmem:[%s245 + $0x78] sm:$0xff]
        %v262 = vld [vmem:[%s245 + $0x80] sm:$0xff]
        %v263 = vld [vmem:[%s245 + $0x88] sm:$0xff]
        %v264 = vld [vmem:[%s245 + $0x90] sm:$0xff]
        %v265 = vld [vmem:[%s245 + $0x98] sm:$0xff]
        %v266 = vld [vmem:[%s245 + $0xa0] sm:$0xff]
        %v267 = vld [vmem:[%s245 + $0xa8] sm:$0xff]
        %v268 = vld [vmem:[%s245 + $0xb0] sm:$0xff]
        %v269 = vld [vmem:[%s245 + $0xb8] sm:$0xff]
        %v270 = vld [vmem:[%s245 + $0xc0] sm:$0xff]
        %v271 = vld [vmem:[%s245 + $0xc8] sm:$0xff]
        %v272 = vld [vmem:[%s245 + $0xd0] sm:$0xff]
        %v273 = vld [vmem:[%s245 + $0xd8] sm:$0xff]
        %v274 = vld [vmem:[%s245 + $0xe0] sm:$0xff]
        %v275 = vld [vmem:[%s245 + $0xe8] sm:$0xff]
        %v276 = vld [vmem:[%s245 + $0xf0] sm:$0xff]
        %v277 = vld [vmem:[%s245 + $0xf8] sm:$0xff]
        %v278 = vld [vmem:[%s228] sm:$0xff]
        %v279 = vld [vmem:[%s228 + $0x8] sm:$0xff]
        %s280 = sadd.s32 %s243, 1
        %s281 = smul.u32 %s280, 16
        %s282 = scalar_lea.vmem %s224, %s281
        %v283 = vld [vmem:[%s282] sm:$0xff]
        %v284 = vld [vmem:[%s282 + $0x8] sm:$0xff]
        %v285 = vld [vmem:[%s282 + $0x10] sm:$0xff]
        %v286 = vld [vmem:[%s282 + $0x18] sm:$0xff]
        %v287 = vld [vmem:[%s282 + $0x20] sm:$0xff]
        %v288 = vld [vmem:[%s282 + $0x28] sm:$0xff]
        %v289 = vld [vmem:[%s282 + $0x30] sm:$0xff]
        %v290 = vld [vmem:[%s282 + $0x38] sm:$0xff]
        %v291 = vld [vmem:[%s282 + $0x40] sm:$0xff]
        %v292 = vld [vmem:[%s282 + $0x48] sm:$0xff]
        %v293 = vld [vmem:[%s282 + $0x50] sm:$0xff]
        %v294 = vld [vmem:[%s282 + $0x58] sm:$0xff]
        %v295 = vld [vmem:[%s282 + $0x60] sm:$0xff]
        %v296 = vld [vmem:[%s282 + $0x68] sm:$0xff]
        %v297 = vld [vmem:[%s282 + $0x70] sm:$0xff]
        %v298 = vld [vmem:[%s282 + $0x78] sm:$0xff]
        %v299 = vld [vmem:[%s282 + $0x80] sm:$0xff]
        %v300 = vld [vmem:[%s282 + $0x88] sm:$0xff]
        %v301 = vld [vmem:[%s282 + $0x90] sm:$0xff]
        %v302 = vld [vmem:[%s282 + $0x98] sm:$0xff]
        %v303 = vld [vmem:[%s282 + $0xa0] sm:$0xff]
        %v304 = vld [vmem:[%s282 + $0xa8] sm:$0xff]
        %v305 = vld [vmem:[%s282 + $0xb0] sm:$0xff]
        %v306 = vld [vmem:[%s282 + $0xb8] sm:$0xff]
        %v307 = vld [vmem:[%s282 + $0xc0] sm:$0xff]
        %v308 = vld [vmem:[%s282 + $0xc8] sm:$0xff]
        %v309 = vld [vmem:[%s282 + $0xd0] sm:$0xff]
        %v310 = vld [vmem:[%s282 + $0xd8] sm:$0xff]
        %v311 = vld [vmem:[%s282 + $0xe0] sm:$0xff]
        %v312 = vld [vmem:[%s282 + $0xe8] sm:$0xff]
        %v313 = vld [vmem:[%s282 + $0xf0] sm:$0xff]
        %v314 = vld [vmem:[%s282 + $0xf8] sm:$0xff]
        %s315 = scalar_lea.vmem %s228, 16
        %v316 = vld [vmem:[%s315] sm:$0xff]
        %v317 = vld [vmem:[%s315 + $0x8] sm:$0xff]
        %vm318 = vcmask 130048
        %v320 = vsel %vm318, %v283, 0
        %v323 = vsel %vm318, %v284, 0
        %v326 = vsel %vm318, %v285, 0
        %v329 = vsel %vm318, %v286, 0
        %v332 = vsel %vm318, %v287, 0
        %v335 = vsel %vm318, %v288, 0
        %v338 = vsel %vm318, %v289, 0
        %v341 = vsel %vm318, %v290, 0
        %v344 = vsel %vm318, %v291, 0
        %v347 = vsel %vm318, %v292, 0
        %v350 = vsel %vm318, %v293, 0
        %v353 = vsel %vm318, %v294, 0
        %v356 = vsel %vm318, %v295, 0
        %v359 = vsel %vm318, %v296, 0
        %v362 = vsel %vm318, %v297, 0
        %v365 = vsel %vm318, %v298, 0
        %v368 = vsel %vm318, %v299, 0
        %v371 = vsel %vm318, %v300, 0
        %v374 = vsel %vm318, %v301, 0
        %v377 = vsel %vm318, %v302, 0
        %v380 = vsel %vm318, %v303, 0
        %v383 = vsel %vm318, %v304, 0
        %v386 = vsel %vm318, %v305, 0
        %v389 = vsel %vm318, %v306, 0
        %v392 = vsel %vm318, %v307, 0
        %v395 = vsel %vm318, %v308, 0
        %v398 = vsel %vm318, %v309, 0
        %v401 = vsel %vm318, %v310, 0
        %v404 = vsel %vm318, %v311, 0
        %v407 = vsel %vm318, %v312, 0
        %v410 = vsel %vm318, %v313, 0
        %v413 = vsel %vm318, %v314, 0
        %415 = vmatprep.subr.mxu0 0.0
        %416 = vmatpush1.msra.mxu0 0.0
        %417 = vmatprep.subr.mxu0 0.0
        %418 = vmatpush1.msra.mxu0 0.0
        %419 = vmatprep.subr.mxu0 0.0
        %420 = vmatpush1.msra.mxu0 0.0
        %421 = vmatprep.subr.mxu0 0.0
        %422 = vmatpush1.msra.mxu0 0.0
        %423 = vmatprep.subr.mxu0 0.0
        %424 = vmatpush1.msra.mxu0 0.0
        %425 = vmatprep.subr.mxu0 0.0
        %426 = vmatpush1.msra.mxu0 0.0
        %427 = vmatprep.subr.mxu0 0.0
        %428 = vmatpush1.msra.mxu0 0.0
        %429 = vmatprep.subr.mxu0 0.0
        %430 = vmatpush1.msra.mxu0 0.0
        %431 = vmatprep.subr.mxu0 0.0
        %432 = vmatpush1.msra.mxu0 0.0
        %433 = vmatprep.subr.mxu0 0.0
        %434 = vmatpush1.msra.mxu0 0.0
        %435 = vmatprep.subr.mxu0 0.0
        %436 = vmatpush1.msra.mxu0 0.0
        %437 = vmatprep.subr.mxu0 0.0
        %438 = vmatpush1.msra.mxu0 0.0
        %439 = vmatprep.subr.mxu0 0.0
        %440 = vmatpush1.msra.mxu0 0.0
        %441 = vmatprep.subr.mxu0 0.0
        %442 = vmatpush1.msra.mxu0 0.0
        %443 = vmatprep.subr.mxu0 0.0
        %444 = vmatpush1.msra.mxu0 %v317
        %445 = vmatprep.subr.mxu0 0.0
        %446 = vmatpush1.msra.mxu0 %v316
        %447 = vmatprep.subr.mxu0 0.0
        %448 = vmatpush2.msra.mxu0 0.0
        %449 = vmatprep.subr.mxu0 0.0
        %450 = vmatpush2.msra.mxu0 0.0
        %451 = vmatprep.subr.mxu0 0.0
        %452 = vmatpush2.msra.mxu0 0.0
        %453 = vmatprep.subr.mxu0 0.0
        %454 = vmatpush2.msra.mxu0 0.0
        %455 = vmatprep.subr.mxu0 0.0
        %456 = vmatpush2.msra.mxu0 0.0
        %457 = vmatprep.subr.mxu0 0.0
        %458 = vmatpush2.msra.mxu0 0.0
        %459 = vmatprep.subr.mxu0 0.0
        %460 = vmatpush2.msra.mxu0 0.0
        %461 = vmatprep.subr.mxu0 0.0
        %462 = vmatpush2.msra.mxu0 0.0
        %463 = vmatprep.subr.mxu0 0.0
        %464 = vmatpush2.msra.mxu0 0.0
        %465 = vmatprep.subr.mxu0 0.0
        %466 = vmatpush2.msra.mxu0 0.0
        %467 = vmatprep.subr.mxu0 0.0
        %468 = vmatpush2.msra.mxu0 0.0
        %469 = vmatprep.subr.mxu0 0.0
        %470 = vmatpush2.msra.mxu0 0.0
        %471 = vmatprep.subr.mxu0 0.0
        %472 = vmatpush2.msra.mxu0 0.0
        %473 = vmatprep.subr.mxu0 0.0
        %474 = vmatpush2.msra.mxu0 0.0
        %475 = vmatprep.subr.mxu0 0.0
        %476 = vmatpush2.msra.mxu0 0.0
        %477 = vmatprep.subr.mxu0 0.0
        %478 = vmatpush2.msra.mxu0 0.0
        %479 = vmatprep.mubr.f32.mxu0 0.0
        %480 = vmatmul.mubr.f32.gmra.mxu0 %v320
        %v481 = vpop.f32.mrf.mxu0
        %v482 = vadd.f32 0.0, %v481
        %v483 = vpop.f32.mrf.mxu0
        %484 = vmatprep.mubr.f32.mxu0 0.0
        %485 = vmatmul.mubr.f32.gmra.mxu0 %v323
        %v486 = vpop.f32.mrf.mxu0
        %v487 = vadd.f32 0.0, %v486
        %v488 = vpop.f32.mrf.mxu0
        %489 = vmatprep.mubr.f32.mxu0 0.0
        %490 = vmatmul.mubr.f32.gmra.mxu0 %v326
        %v491 = vpop.f32.mrf.mxu0
        %v492 = vadd.f32 0.0, %v491
        %v493 = vpop.f32.mrf.mxu0
        %494 = vmatprep.mubr.f32.mxu0 0.0
        %495 = vmatmul.mubr.f32.gmra.mxu0 %v329
        %v496 = vpop.f32.mrf.mxu0
        %v497 = vadd.f32 0.0, %v496
        %v498 = vpop.f32.mrf.mxu0
        %499 = vmatprep.mubr.f32.mxu0 0.0
        %500 = vmatmul.mubr.f32.gmra.mxu0 %v332
        %v501 = vpop.f32.mrf.mxu0
        %v502 = vadd.f32 0.0, %v501
        %v503 = vpop.f32.mrf.mxu0
        %504 = vmatprep.mubr.f32.mxu0 0.0
        %505 = vmatmul.mubr.f32.gmra.mxu0 %v335
        %v506 = vpop.f32.mrf.mxu0
        %v507 = vadd.f32 0.0, %v506
        %v508 = vpop.f32.mrf.mxu0
        %509 = vmatprep.mubr.f32.mxu0 0.0
        %510 = vmatmul.mubr.f32.gmra.mxu0 %v338
        %v511 = vpop.f32.mrf.mxu0
        %v512 = vadd.f32 0.0, %v511
        %v513 = vpop.f32.mrf.mxu0
        %514 = vmatprep.mubr.f32.mxu0 0.0
        %515 = vmatmul.mubr.f32.gmra.mxu0 %v341
        %v516 = vpop.f32.mrf.mxu0
        %v517 = vadd.f32 0.0, %v516
        %v518 = vpop.f32.mrf.mxu0
        %519 = vmatprep.mubr.f32.mxu0 0.0
        %520 = vmatmul.mubr.f32.gmra.mxu0 %v344
        %v521 = vpop.f32.mrf.mxu0
        %v522 = vadd.f32 0.0, %v521
        %v523 = vpop.f32.mrf.mxu0
        %524 = vmatprep.mubr.f32.mxu0 0.0
        %525 = vmatmul.mubr.f32.gmra.mxu0 %v347
        %v526 = vpop.f32.mrf.mxu0
        %v527 = vadd.f32 0.0, %v526
        %v528 = vpop.f32.mrf.mxu0
        %529 = vmatprep.mubr.f32.mxu0 0.0
        %530 = vmatmul.mubr.f32.gmra.mxu0 %v350
        %v531 = vpop.f32.mrf.mxu0
        %v532 = vadd.f32 0.0, %v531
        %v533 = vpop.f32.mrf.mxu0
        %534 = vmatprep.mubr.f32.mxu0 0.0
        %535 = vmatmul.mubr.f32.gmra.mxu0 %v353
        %v536 = vpop.f32.mrf.mxu0
        %v537 = vadd.f32 0.0, %v536
        %v538 = vpop.f32.mrf.mxu0
        %539 = vmatprep.mubr.f32.mxu0 0.0
        %540 = vmatmul.mubr.f32.gmra.mxu0 %v356
        %v541 = vpop.f32.mrf.mxu0
        %v542 = vadd.f32 0.0, %v541
        %v543 = vpop.f32.mrf.mxu0
        %544 = vmatprep.mubr.f32.mxu0 0.0
        %545 = vmatmul.mubr.f32.gmra.mxu0 %v359
        %v546 = vpop.f32.mrf.mxu0
        %v547 = vadd.f32 0.0, %v546
        %v548 = vpop.f32.mrf.mxu0
        %549 = vmatprep.mubr.f32.mxu0 0.0
        %550 = vmatmul.mubr.f32.gmra.mxu0 %v362
        %v551 = vpop.f32.mrf.mxu0
        %v552 = vadd.f32 0.0, %v551
        %v553 = vpop.f32.mrf.mxu0
        %554 = vmatprep.mubr.f32.mxu0 0.0
        %555 = vmatmul.mubr.f32.gmra.mxu0 %v365
        %v556 = vpop.f32.mrf.mxu0
        %v557 = vadd.f32 0.0, %v556
        %v558 = vpop.f32.mrf.mxu0
        %559 = vmatprep.mubr.f32.mxu0 0.0
        %560 = vmatmul.mubr.f32.gmra.mxu0 %v368
        %v561 = vpop.f32.mrf.mxu0
        %v562 = vadd.f32 0.0, %v561
        %v563 = vpop.f32.mrf.mxu0
        %564 = vmatprep.mubr.f32.mxu0 0.0
        %565 = vmatmul.mubr.f32.gmra.mxu0 %v371
        %v566 = vpop.f32.mrf.mxu0
        %v567 = vadd.f32 0.0, %v566
        %v568 = vpop.f32.mrf.mxu0
        %569 = vmatprep.mubr.f32.mxu0 0.0
        %570 = vmatmul.mubr.f32.gmra.mxu0 %v374
        %v571 = vpop.f32.mrf.mxu0
        %v572 = vadd.f32 0.0, %v571
        %v573 = vpop.f32.mrf.mxu0
        %574 = vmatprep.mubr.f32.mxu0 0.0
        %575 = vmatmul.mubr.f32.gmra.mxu0 %v377
        %v576 = vpop.f32.mrf.mxu0
        %v577 = vadd.f32 0.0, %v576
        %v578 = vpop.f32.mrf.mxu0
        %579 = vmatprep.mubr.f32.mxu0 0.0
        %580 = vmatmul.mubr.f32.gmra.mxu0 %v380
        %v581 = vpop.f32.mrf.mxu0
        %v582 = vadd.f32 0.0, %v581
        %v583 = vpop.f32.mrf.mxu0
        %584 = vmatprep.mubr.f32.mxu0 0.0
        %585 = vmatmul.mubr.f32.gmra.mxu0 %v383
        %v586 = vpop.f32.mrf.mxu0
        %v587 = vadd.f32 0.0, %v586
        %v588 = vpop.f32.mrf.mxu0
        %589 = vmatprep.mubr.f32.mxu0 0.0
        %590 = vmatmul.mubr.f32.gmra.mxu0 %v386
        %v591 = vpop.f32.mrf.mxu0
        %v592 = vadd.f32 0.0, %v591
        %v593 = vpop.f32.mrf.mxu0
        %594 = vmatprep.mubr.f32.mxu0 0.0
        %595 = vmatmul.mubr.f32.gmra.mxu0 %v389
        %v596 = vpop.f32.mrf.mxu0
        %v597 = vadd.f32 0.0, %v596
        %v598 = vpop.f32.mrf.mxu0
        %599 = vmatprep.mubr.f32.mxu0 0.0
        %600 = vmatmul.mubr.f32.gmra.mxu0 %v392
        %v601 = vpop.f32.mrf.mxu0
        %v602 = vadd.f32 0.0, %v601
        %v603 = vpop.f32.mrf.mxu0
        %604 = vmatprep.mubr.f32.mxu0 0.0
        %605 = vmatmul.mubr.f32.gmra.mxu0 %v395
        %v606 = vpop.f32.mrf.mxu0
        %v607 = vadd.f32 0.0, %v606
        %v608 = vpop.f32.mrf.mxu0
        %609 = vmatprep.mubr.f32.mxu0 0.0
        %610 = vmatmul.mubr.f32.gmra.mxu0 %v398
        %v611 = vpop.f32.mrf.mxu0
        %v612 = vadd.f32 0.0, %v611
        %v613 = vpop.f32.mrf.mxu0
        %614 = vmatprep.mubr.f32.mxu0 0.0
        %615 = vmatmul.mubr.f32.gmra.mxu0 %v401
        %v616 = vpop.f32.mrf.mxu0
        %v617 = vadd.f32 0.0, %v616
        %v618 = vpop.f32.mrf.mxu0
        %619 = vmatprep.mubr.f32.mxu0 0.0
        %620 = vmatmul.mubr.f32.gmra.mxu0 %v404
        %v621 = vpop.f32.mrf.mxu0
        %v622 = vadd.f32 0.0, %v621
        %v623 = vpop.f32.mrf.mxu0
        %624 = vmatprep.mubr.f32.mxu0 0.0
        %625 = vmatmul.mubr.f32.gmra.mxu0 %v407
        %v626 = vpop.f32.mrf.mxu0
        %v627 = vadd.f32 0.0, %v626
        %v628 = vpop.f32.mrf.mxu0
        %629 = vmatprep.mubr.f32.mxu0 0.0
        %630 = vmatmul.mubr.f32.gmra.mxu0 %v410
        %v631 = vpop.f32.mrf.mxu0
        %v632 = vadd.f32 0.0, %v631
        %v633 = vpop.f32.mrf.mxu0
        %634 = vmatprep.mubr.f32.mxu0 0.0
        %635 = vmatmul.mubr.f32.gmra.mxu0 %v413
        %v636 = vpop.f32.mrf.mxu0
        %v637 = vadd.f32 0.0, %v636
        %v638 = vpop.f32.mrf.mxu0
        %639 = vdwg.mxu0
        %v641 = vsel %vm318, %v246, 0
        %v644 = vsel %vm318, %v247, 0
        %v647 = vsel %vm318, %v248, 0
        %v650 = vsel %vm318, %v249, 0
        %v653 = vsel %vm318, %v250, 0
        %v656 = vsel %vm318, %v251, 0
        %v659 = vsel %vm318, %v252, 0
        %v662 = vsel %vm318, %v253, 0
        %v665 = vsel %vm318, %v254, 0
        %v668 = vsel %vm318, %v255, 0
        %v671 = vsel %vm318, %v256, 0
        %v674 = vsel %vm318, %v257, 0
        %v677 = vsel %vm318, %v258, 0
        %v680 = vsel %vm318, %v259, 0
        %v683 = vsel %vm318, %v260, 0
        %v686 = vsel %vm318, %v261, 0
        %v689 = vsel %vm318, %v262, 0
        %v692 = vsel %vm318, %v263, 0
        %v695 = vsel %vm318, %v264, 0
        %v698 = vsel %vm318, %v265, 0
        %v701 = vsel %vm318, %v266, 0
        %v704 = vsel %vm318, %v267, 0
        %v707 = vsel %vm318, %v268, 0
        %v710 = vsel %vm318, %v269, 0
        %v713 = vsel %vm318, %v270, 0
        %v716 = vsel %vm318, %v271, 0
        %v719 = vsel %vm318, %v272, 0
        %v722 = vsel %vm318, %v273, 0
        %v725 = vsel %vm318, %v274, 0
        %v728 = vsel %vm318, %v275, 0
        %v731 = vsel %vm318, %v276, 0
        %v734 = vsel %vm318, %v277, 0
        %736 = vmatprep.subr.mxu0 0.0
        %737 = vmatpush1.msra.mxu0 0.0
        %738 = vmatprep.subr.mxu0 0.0
        %739 = vmatpush1.msra.mxu0 0.0
        %740 = vmatprep.subr.mxu0 0.0
        %741 = vmatpush1.msra.mxu0 0.0
        %742 = vmatprep.subr.mxu0 0.0
        %743 = vmatpush1.msra.mxu0 0.0
        %744 = vmatprep.subr.mxu0 0.0
        %745 = vmatpush1.msra.mxu0 0.0
        %746 = vmatprep.subr.mxu0 0.0
        %747 = vmatpush1.msra.mxu0 0.0
        %748 = vmatprep.subr.mxu0 0.0
        %749 = vmatpush1.msra.mxu0 0.0
        %750 = vmatprep.subr.mxu0 0.0
        %751 = vmatpush1.msra.mxu0 0.0
        %752 = vmatprep.subr.mxu0 0.0
        %753 = vmatpush1.msra.mxu0 0.0
        %754 = vmatprep.subr.mxu0 0.0
        %755 = vmatpush1.msra.mxu0 0.0
        %756 = vmatprep.subr.mxu0 0.0
        %757 = vmatpush1.msra.mxu0 0.0
        %758 = vmatprep.subr.mxu0 0.0
        %759 = vmatpush1.msra.mxu0 0.0
        %760 = vmatprep.subr.mxu0 0.0
        %761 = vmatpush1.msra.mxu0 0.0
        %762 = vmatprep.subr.mxu0 0.0
        %763 = vmatpush1.msra.mxu0 0.0
        %764 = vmatprep.subr.mxu0 0.0
        %765 = vmatpush1.msra.mxu0 %v279
        %766 = vmatprep.subr.mxu0 0.0
        %767 = vmatpush1.msra.mxu0 %v278
        %768 = vmatprep.subr.mxu0 0.0
        %769 = vmatpush2.msra.mxu0 0.0
        %770 = vmatprep.subr.mxu0 0.0
        %771 = vmatpush2.msra.mxu0 0.0
        %772 = vmatprep.subr.mxu0 0.0
        %773 = vmatpush2.msra.mxu0 0.0
        %774 = vmatprep.subr.mxu0 0.0
        %775 = vmatpush2.msra.mxu0 0.0
        %776 = vmatprep.subr.mxu0 0.0
        %777 = vmatpush2.msra.mxu0 0.0
        %778 = vmatprep.subr.mxu0 0.0
        %779 = vmatpush2.msra.mxu0 0.0
        %780 = vmatprep.subr.mxu0 0.0
        %781 = vmatpush2.msra.mxu0 0.0
        %782 = vmatprep.subr.mxu0 0.0
        %783 = vmatpush2.msra.mxu0 0.0
        %784 = vmatprep.subr.mxu0 0.0
        %785 = vmatpush2.msra.mxu0 0.0
        %786 = vmatprep.subr.mxu0 0.0
        %787 = vmatpush2.msra.mxu0 0.0
        %788 = vmatprep.subr.mxu0 0.0
        %789 = vmatpush2.msra.mxu0 0.0
        %790 = vmatprep.subr.mxu0 0.0
        %791 = vmatpush2.msra.mxu0 0.0
        %792 = vmatprep.subr.mxu0 0.0
        %793 = vmatpush2.msra.mxu0 0.0
        %794 = vmatprep.subr.mxu0 0.0
        %795 = vmatpush2.msra.mxu0 0.0
        %796 = vmatprep.subr.mxu0 0.0
        %797 = vmatpush2.msra.mxu0 0.0
        %798 = vmatprep.subr.mxu0 0.0
        %799 = vmatpush2.msra.mxu0 0.0
        %800 = vmatprep.mubr.f32.mxu0 0.0
        %801 = vmatmul.mubr.f32.gmra.mxu0 %v641
        %v802 = vpop.f32.mrf.mxu0
        %v803 = vadd.f32 %v482, %v802
        %v804 = vpop.f32.mrf.mxu0
        %805 = vmatprep.mubr.f32.mxu0 0.0
        %806 = vmatmul.mubr.f32.gmra.mxu0 %v644
        %v807 = vpop.f32.mrf.mxu0
        %v808 = vadd.f32 %v487, %v807
        %v809 = vpop.f32.mrf.mxu0
        %810 = vmatprep.mubr.f32.mxu0 0.0
        %811 = vmatmul.mubr.f32.gmra.mxu0 %v647
        %v812 = vpop.f32.mrf.mxu0
        %v813 = vadd.f32 %v492, %v812
        %v814 = vpop.f32.mrf.mxu0
        %815 = vmatprep.mubr.f32.mxu0 0.0
        %816 = vmatmul.mubr.f32.gmra.mxu0 %v650
        %v817 = vpop.f32.mrf.mxu0
        %v818 = vadd.f32 %v497, %v817
        %v819 = vpop.f32.mrf.mxu0
        %820 = vmatprep.mubr.f32.mxu0 0.0
        %821 = vmatmul.mubr.f32.gmra.mxu0 %v653
        %v822 = vpop.f32.mrf.mxu0
        %v823 = vadd.f32 %v502, %v822
        %v824 = vpop.f32.mrf.mxu0
        %825 = vmatprep.mubr.f32.mxu0 0.0
        %826 = vmatmul.mubr.f32.gmra.mxu0 %v656
        %v827 = vpop.f32.mrf.mxu0
        %v828 = vadd.f32 %v507, %v827
        %v829 = vpop.f32.mrf.mxu0
        %830 = vmatprep.mubr.f32.mxu0 0.0
        %831 = vmatmul.mubr.f32.gmra.mxu0 %v659
        %v832 = vpop.f32.mrf.mxu0
        %v833 = vadd.f32 %v512, %v832
        %v834 = vpop.f32.mrf.mxu0
        %835 = vmatprep.mubr.f32.mxu0 0.0
        %836 = vmatmul.mubr.f32.gmra.mxu0 %v662
        %v837 = vpop.f32.mrf.mxu0
        %v838 = vadd.f32 %v517, %v837
        %v839 = vpop.f32.mrf.mxu0
        %840 = vmatprep.mubr.f32.mxu0 0.0
        %841 = vmatmul.mubr.f32.gmra.mxu0 %v665
        %v842 = vpop.f32.mrf.mxu0
        %v843 = vadd.f32 %v522, %v842
        %v844 = vpop.f32.mrf.mxu0
        %845 = vmatprep.mubr.f32.mxu0 0.0
        %846 = vmatmul.mubr.f32.gmra.mxu0 %v668
        %v847 = vpop.f32.mrf.mxu0
        %v848 = vadd.f32 %v527, %v847
        %v849 = vpop.f32.mrf.mxu0
        %850 = vmatprep.mubr.f32.mxu0 0.0
        %851 = vmatmul.mubr.f32.gmra.mxu0 %v671
        %v852 = vpop.f32.mrf.mxu0
        %v853 = vadd.f32 %v532, %v852
        %v854 = vpop.f32.mrf.mxu0
        %855 = vmatprep.mubr.f32.mxu0 0.0
        %856 = vmatmul.mubr.f32.gmra.mxu0 %v674
        %v857 = vpop.f32.mrf.mxu0
        %v858 = vadd.f32 %v537, %v857
        %v859 = vpop.f32.mrf.mxu0
        %860 = vmatprep.mubr.f32.mxu0 0.0
        %861 = vmatmul.mubr.f32.gmra.mxu0 %v677
        %v862 = vpop.f32.mrf.mxu0
        %v863 = vadd.f32 %v542, %v862
        %v864 = vpop.f32.mrf.mxu0
        %865 = vmatprep.mubr.f32.mxu0 0.0
        %866 = vmatmul.mubr.f32.gmra.mxu0 %v680
        %v867 = vpop.f32.mrf.mxu0
        %v868 = vadd.f32 %v547, %v867
        %v869 = vpop.f32.mrf.mxu0
        %870 = vmatprep.mubr.f32.mxu0 0.0
        %871 = vmatmul.mubr.f32.gmra.mxu0 %v683
        %v872 = vpop.f32.mrf.mxu0
        %v873 = vadd.f32 %v552, %v872
        %v874 = vpop.f32.mrf.mxu0
        %875 = vmatprep.mubr.f32.mxu0 0.0
        %876 = vmatmul.mubr.f32.gmra.mxu0 %v686
        %v877 = vpop.f32.mrf.mxu0
        %v878 = vadd.f32 %v557, %v877
        %v879 = vpop.f32.mrf.mxu0
        %880 = vmatprep.mubr.f32.mxu0 0.0
        %881 = vmatmul.mubr.f32.gmra.mxu0 %v689
        %v882 = vpop.f32.mrf.mxu0
        %v883 = vadd.f32 %v562, %v882
        %v884 = vpop.f32.mrf.mxu0
        %885 = vmatprep.mubr.f32.mxu0 0.0
        %886 = vmatmul.mubr.f32.gmra.mxu0 %v692
        %v887 = vpop.f32.mrf.mxu0
        %v888 = vadd.f32 %v567, %v887
        %v889 = vpop.f32.mrf.mxu0
        %890 = vmatprep.mubr.f32.mxu0 0.0
        %891 = vmatmul.mubr.f32.gmra.mxu0 %v695
        %v892 = vpop.f32.mrf.mxu0
        %v893 = vadd.f32 %v572, %v892
        %v894 = vpop.f32.mrf.mxu0
        %895 = vmatprep.mubr.f32.mxu0 0.0
        %896 = vmatmul.mubr.f32.gmra.mxu0 %v698
        %v897 = vpop.f32.mrf.mxu0
        %v898 = vadd.f32 %v577, %v897
        %v899 = vpop.f32.mrf.mxu0
        %900 = vmatprep.mubr.f32.mxu0 0.0
        %901 = vmatmul.mubr.f32.gmra.mxu0 %v701
        %v902 = vpop.f32.mrf.mxu0
        %v903 = vadd.f32 %v582, %v902
        %v904 = vpop.f32.mrf.mxu0
        %905 = vmatprep.mubr.f32.mxu0 0.0
        %906 = vmatmul.mubr.f32.gmra.mxu0 %v704
        %v907 = vpop.f32.mrf.mxu0
        %v908 = vadd.f32 %v587, %v907
        %v909 = vpop.f32.mrf.mxu0
        %910 = vmatprep.mubr.f32.mxu0 0.0
        %911 = vmatmul.mubr.f32.gmra.mxu0 %v707
        %v912 = vpop.f32.mrf.mxu0
        %v913 = vadd.f32 %v592, %v912
        %v914 = vpop.f32.mrf.mxu0
        %915 = vmatprep.mubr.f32.mxu0 0.0
        %916 = vmatmul.mubr.f32.gmra.mxu0 %v710
        %v917 = vpop.f32.mrf.mxu0
        %v918 = vadd.f32 %v597, %v917
        %v919 = vpop.f32.mrf.mxu0
        %920 = vmatprep.mubr.f32.mxu0 0.0
        %921 = vmatmul.mubr.f32.gmra.mxu0 %v713
        %v922 = vpop.f32.mrf.mxu0
        %v923 = vadd.f32 %v602, %v922
        %v924 = vpop.f32.mrf.mxu0
        %925 = vmatprep.mubr.f32.mxu0 0.0
        %926 = vmatmul.mubr.f32.gmra.mxu0 %v716
        %v927 = vpop.f32.mrf.mxu0
        %v928 = vadd.f32 %v607, %v927
        %v929 = vpop.f32.mrf.mxu0
        %930 = vmatprep.mubr.f32.mxu0 0.0
        %931 = vmatmul.mubr.f32.gmra.mxu0 %v719
        %v932 = vpop.f32.mrf.mxu0
        %v933 = vadd.f32 %v612, %v932
        %v934 = vpop.f32.mrf.mxu0
        %935 = vmatprep.mubr.f32.mxu0 0.0
        %936 = vmatmul.mubr.f32.gmra.mxu0 %v722
        %v937 = vpop.f32.mrf.mxu0
        %v938 = vadd.f32 %v617, %v937
        %v939 = vpop.f32.mrf.mxu0
        %940 = vmatprep.mubr.f32.mxu0 0.0
        %941 = vmatmul.mubr.f32.gmra.mxu0 %v725
        %v942 = vpop.f32.mrf.mxu0
        %v943 = vadd.f32 %v622, %v942
        %v944 = vpop.f32.mrf.mxu0
        %945 = vmatprep.mubr.f32.mxu0 0.0
        %946 = vmatmul.mubr.f32.gmra.mxu0 %v728
        %v947 = vpop.f32.mrf.mxu0
        %v948 = vadd.f32 %v627, %v947
        %v949 = vpop.f32.mrf.mxu0
        %950 = vmatprep.mubr.f32.mxu0 0.0
        %951 = vmatmul.mubr.f32.gmra.mxu0 %v731
        %v952 = vpop.f32.mrf.mxu0
        %v953 = vadd.f32 %v632, %v952
        %v954 = vpop.f32.mrf.mxu0
        %955 = vmatprep.mubr.f32.mxu0 0.0
        %956 = vmatmul.mubr.f32.gmra.mxu0 %v734
        %v957 = vpop.f32.mrf.mxu0
        %v958 = vadd.f32 %v637, %v957
        %v959 = vpop.f32.mrf.mxu0
        %960 = vdwg.mxu0
        %s961 = sadd.s32 %s243, 2
        %s962 = smul.u32 %s961, 16
        %s963 = scalar_lea.vmem %s224, %s962
        %v964 = vld [vmem:[%s963] sm:$0xff]
        %v965 = vld [vmem:[%s963 + $0x8] sm:$0xff]
        %v966 = vld [vmem:[%s963 + $0x10] sm:$0xff]
        %v967 = vld [vmem:[%s963 + $0x18] sm:$0xff]
        %v968 = vld [vmem:[%s963 + $0x20] sm:$0xff]
        %v969 = vld [vmem:[%s963 + $0x28] sm:$0xff]
        %v970 = vld [vmem:[%s963 + $0x30] sm:$0xff]
        %v971 = vld [vmem:[%s963 + $0x38] sm:$0xff]
        %v972 = vld [vmem:[%s963 + $0x40] sm:$0xff]
        %v973 = vld [vmem:[%s963 + $0x48] sm:$0xff]
        %v974 = vld [vmem:[%s963 + $0x50] sm:$0xff]
        %v975 = vld [vmem:[%s963 + $0x58] sm:$0xff]
        %v976 = vld [vmem:[%s963 + $0x60] sm:$0xff]
        %v977 = vld [vmem:[%s963 + $0x68] sm:$0xff]
        %v978 = vld [vmem:[%s963 + $0x70] sm:$0xff]
        %v979 = vld [vmem:[%s963 + $0x78] sm:$0xff]
        %v980 = vld [vmem:[%s963 + $0x80] sm:$0xff]
        %v981 = vld [vmem:[%s963 + $0x88] sm:$0xff]
        %v982 = vld [vmem:[%s963 + $0x90] sm:$0xff]
        %v983 = vld [vmem:[%s963 + $0x98] sm:$0xff]
        %v984 = vld [vmem:[%s963 + $0xa0] sm:$0xff]
        %v985 = vld [vmem:[%s963 + $0xa8] sm:$0xff]
        %v986 = vld [vmem:[%s963 + $0xb0] sm:$0xff]
        %v987 = vld [vmem:[%s963 + $0xb8] sm:$0xff]
        %v988 = vld [vmem:[%s963 + $0xc0] sm:$0xff]
        %v989 = vld [vmem:[%s963 + $0xc8] sm:$0xff]
        %v990 = vld [vmem:[%s963 + $0xd0] sm:$0xff]
        %v991 = vld [vmem:[%s963 + $0xd8] sm:$0xff]
        %v992 = vld [vmem:[%s963 + $0xe0] sm:$0xff]
        %v993 = vld [vmem:[%s963 + $0xe8] sm:$0xff]
        %v994 = vld [vmem:[%s963 + $0xf0] sm:$0xff]
        %v995 = vld [vmem:[%s963 + $0xf8] sm:$0xff]
        %s996 = scalar_lea.vmem %s228, 32
        %v997 = vld [vmem:[%s996] sm:$0xff]
        %v998 = vld [vmem:[%s996 + $0x8] sm:$0xff]
        %v1000 = vsel %vm318, %v964, 0
        %v1003 = vsel %vm318, %v965, 0
        %v1006 = vsel %vm318, %v966, 0
        %v1009 = vsel %vm318, %v967, 0
        %v1012 = vsel %vm318, %v968, 0
        %v1015 = vsel %vm318, %v969, 0
        %v1018 = vsel %vm318, %v970, 0
        %v1021 = vsel %vm318, %v971, 0
        %v1024 = vsel %vm318, %v972, 0
        %v1027 = vsel %vm318, %v973, 0
        %v1030 = vsel %vm318, %v974, 0
        %v1033 = vsel %vm318, %v975, 0
        %v1036 = vsel %vm318, %v976, 0
        %v1039 = vsel %vm318, %v977, 0
        %v1042 = vsel %vm318, %v978, 0
        %v1045 = vsel %vm318, %v979, 0
        %v1048 = vsel %vm318, %v980, 0
        %v1051 = vsel %vm318, %v981, 0
        %v1054 = vsel %vm318, %v982, 0
        %v1057 = vsel %vm318, %v983, 0
        %v1060 = vsel %vm318, %v984, 0
        %v1063 = vsel %vm318, %v985, 0
        %v1066 = vsel %vm318, %v986, 0
        %v1069 = vsel %vm318, %v987, 0
        %v1072 = vsel %vm318, %v988, 0
        %v1075 = vsel %vm318, %v989, 0
        %v1078 = vsel %vm318, %v990, 0
        %v1081 = vsel %vm318, %v991, 0
        %v1084 = vsel %vm318, %v992, 0
        %v1087 = vsel %vm318, %v993, 0
        %v1090 = vsel %vm318, %v994, 0
        %v1093 = vsel %vm318, %v995, 0
        %1095 = vmatprep.subr.mxu0 0.0
        %1096 = vmatpush1.msra.mxu0 0.0
        %1097 = vmatprep.subr.mxu0 0.0
        %1098 = vmatpush1.msra.mxu0 0.0
        %1099 = vmatprep.subr.mxu0 0.0
        %1100 = vmatpush1.msra.mxu0 0.0
        %1101 = vmatprep.subr.mxu0 0.0
        %1102 = vmatpush1.msra.mxu0 0.0
        %1103 = vmatprep.subr.mxu0 0.0
        %1104 = vmatpush1.msra.mxu0 0.0
        %1105 = vmatprep.subr.mxu0 0.0
        %1106 = vmatpush1.msra.mxu0 0.0
        %1107 = vmatprep.subr.mxu0 0.0
        %1108 = vmatpush1.msra.mxu0 0.0
        %1109 = vmatprep.subr.mxu0 0.0
        %1110 = vmatpush1.msra.mxu0 0.0
        %1111 = vmatprep.subr.mxu0 0.0
        %1112 = vmatpush1.msra.mxu0 0.0
        %1113 = vmatprep.subr.mxu0 0.0
        %1114 = vmatpush1.msra.mxu0 0.0
        %1115 = vmatprep.subr.mxu0 0.0
        %1116 = vmatpush1.msra.mxu0 0.0
        %1117 = vmatprep.subr.mxu0 0.0
        %1118 = vmatpush1.msra.mxu0 0.0
        %1119 = vmatprep.subr.mxu0 0.0
        %1120 = vmatpush1.msra.mxu0 0.0
        %1121 = vmatprep.subr.mxu0 0.0
        %1122 = vmatpush1.msra.mxu0 0.0
        %1123 = vmatprep.subr.mxu0 0.0
        %1124 = vmatpush1.msra.mxu0 %v998
        %1125 = vmatprep.subr.mxu0 0.0
        %1126 = vmatpush1.msra.mxu0 %v997
        %1127 = vmatprep.subr.mxu0 0.0
        %1128 = vmatpush2.msra.mxu0 0.0
        %1129 = vmatprep.subr.mxu0 0.0
        %1130 = vmatpush2.msra.mxu0 0.0
        %1131 = vmatprep.subr.mxu0 0.0
        %1132 = vmatpush2.msra.mxu0 0.0
        %1133 = vmatprep.subr.mxu0 0.0
        %1134 = vmatpush2.msra.mxu0 0.0
        %1135 = vmatprep.subr.mxu0 0.0
        %1136 = vmatpush2.msra.mxu0 0.0
        %1137 = vmatprep.subr.mxu0 0.0
        %1138 = vmatpush2.msra.mxu0 0.0
        %1139 = vmatprep.subr.mxu0 0.0
        %1140 = vmatpush2.msra.mxu0 0.0
        %1141 = vmatprep.subr.mxu0 0.0
        %1142 = vmatpush2.msra.mxu0 0.0
        %1143 = vmatprep.subr.mxu0 0.0
        %1144 = vmatpush2.msra.mxu0 0.0
        %1145 = vmatprep.subr.mxu0 0.0
        %1146 = vmatpush2.msra.mxu0 0.0
        %1147 = vmatprep.subr.mxu0 0.0
        %1148 = vmatpush2.msra.mxu0 0.0
        %1149 = vmatprep.subr.mxu0 0.0
        %1150 = vmatpush2.msra.mxu0 0.0
        %1151 = vmatprep.subr.mxu0 0.0
        %1152 = vmatpush2.msra.mxu0 0.0
        %1153 = vmatprep.subr.mxu0 0.0
        %1154 = vmatpush2.msra.mxu0 0.0
        %1155 = vmatprep.subr.mxu0 0.0
        %1156 = vmatpush2.msra.mxu0 0.0
        %1157 = vmatprep.subr.mxu0 0.0
        %1158 = vmatpush2.msra.mxu0 0.0
        %1159 = vmatprep.mubr.f32.mxu0 0.0
        %1160 = vmatmul.mubr.f32.gmra.mxu0 %v1000
        %v1161 = vpop.f32.mrf.mxu0
        %v1162 = vadd.f32 0.0, %v1161
        %v1163 = vpop.f32.mrf.mxu0
        %1164 = vmatprep.mubr.f32.mxu0 0.0
        %1165 = vmatmul.mubr.f32.gmra.mxu0 %v1003
        %v1166 = vpop.f32.mrf.mxu0
        %v1167 = vadd.f32 0.0, %v1166
        %v1168 = vpop.f32.mrf.mxu0
        %1169 = vmatprep.mubr.f32.mxu0 0.0
        %1170 = vmatmul.mubr.f32.gmra.mxu0 %v1006
        %v1171 = vpop.f32.mrf.mxu0
        %v1172 = vadd.f32 0.0, %v1171
        %v1173 = vpop.f32.mrf.mxu0
        %1174 = vmatprep.mubr.f32.mxu0 0.0
        %1175 = vmatmul.mubr.f32.gmra.mxu0 %v1009
        %v1176 = vpop.f32.mrf.mxu0
        %v1177 = vadd.f32 0.0, %v1176
        %v1178 = vpop.f32.mrf.mxu0
        %1179 = vmatprep.mubr.f32.mxu0 0.0
        %1180 = vmatmul.mubr.f32.gmra.mxu0 %v1012
        %v1181 = vpop.f32.mrf.mxu0
        %v1182 = vadd.f32 0.0, %v1181
        %v1183 = vpop.f32.mrf.mxu0
        %1184 = vmatprep.mubr.f32.mxu0 0.0
        %1185 = vmatmul.mubr.f32.gmra.mxu0 %v1015
        %v1186 = vpop.f32.mrf.mxu0
        %v1187 = vadd.f32 0.0, %v1186
        %v1188 = vpop.f32.mrf.mxu0
        %1189 = vmatprep.mubr.f32.mxu0 0.0
        %1190 = vmatmul.mubr.f32.gmra.mxu0 %v1018
        %v1191 = vpop.f32.mrf.mxu0
        %v1192 = vadd.f32 0.0, %v1191
        %v1193 = vpop.f32.mrf.mxu0
        %1194 = vmatprep.mubr.f32.mxu0 0.0
        %1195 = vmatmul.mubr.f32.gmra.mxu0 %v1021
        %v1196 = vpop.f32.mrf.mxu0
        %v1197 = vadd.f32 0.0, %v1196
        %v1198 = vpop.f32.mrf.mxu0
        %1199 = vmatprep.mubr.f32.mxu0 0.0
        %1200 = vmatmul.mubr.f32.gmra.mxu0 %v1024
        %v1201 = vpop.f32.mrf.mxu0
        %v1202 = vadd.f32 0.0, %v1201
        %v1203 = vpop.f32.mrf.mxu0
        %1204 = vmatprep.mubr.f32.mxu0 0.0
        %1205 = vmatmul.mubr.f32.gmra.mxu0 %v1027
        %v1206 = vpop.f32.mrf.mxu0
        %v1207 = vadd.f32 0.0, %v1206
        %v1208 = vpop.f32.mrf.mxu0
        %1209 = vmatprep.mubr.f32.mxu0 0.0
        %1210 = vmatmul.mubr.f32.gmra.mxu0 %v1030
        %v1211 = vpop.f32.mrf.mxu0
        %v1212 = vadd.f32 0.0, %v1211
        %v1213 = vpop.f32.mrf.mxu0
        %1214 = vmatprep.mubr.f32.mxu0 0.0
        %1215 = vmatmul.mubr.f32.gmra.mxu0 %v1033
        %v1216 = vpop.f32.mrf.mxu0
        %v1217 = vadd.f32 0.0, %v1216
        %v1218 = vpop.f32.mrf.mxu0
        %1219 = vmatprep.mubr.f32.mxu0 0.0
        %1220 = vmatmul.mubr.f32.gmra.mxu0 %v1036
        %v1221 = vpop.f32.mrf.mxu0
        %v1222 = vadd.f32 0.0, %v1221
        %v1223 = vpop.f32.mrf.mxu0
        %1224 = vmatprep.mubr.f32.mxu0 0.0
        %1225 = vmatmul.mubr.f32.gmra.mxu0 %v1039
        %v1226 = vpop.f32.mrf.mxu0
        %v1227 = vadd.f32 0.0, %v1226
        %v1228 = vpop.f32.mrf.mxu0
        %1229 = vmatprep.mubr.f32.mxu0 0.0
        %1230 = vmatmul.mubr.f32.gmra.mxu0 %v1042
        %v1231 = vpop.f32.mrf.mxu0
        %v1232 = vadd.f32 0.0, %v1231
        %v1233 = vpop.f32.mrf.mxu0
        %1234 = vmatprep.mubr.f32.mxu0 0.0
        %1235 = vmatmul.mubr.f32.gmra.mxu0 %v1045
        %v1236 = vpop.f32.mrf.mxu0
        %v1237 = vadd.f32 0.0, %v1236
        %v1238 = vpop.f32.mrf.mxu0
        %1239 = vmatprep.mubr.f32.mxu0 0.0
        %1240 = vmatmul.mubr.f32.gmra.mxu0 %v1048
        %v1241 = vpop.f32.mrf.mxu0
        %v1242 = vadd.f32 0.0, %v1241
        %v1243 = vpop.f32.mrf.mxu0
        %1244 = vmatprep.mubr.f32.mxu0 0.0
        %1245 = vmatmul.mubr.f32.gmra.mxu0 %v1051
        %v1246 = vpop.f32.mrf.mxu0
        %v1247 = vadd.f32 0.0, %v1246
        %v1248 = vpop.f32.mrf.mxu0
        %1249 = vmatprep.mubr.f32.mxu0 0.0
        %1250 = vmatmul.mubr.f32.gmra.mxu0 %v1054
        %v1251 = vpop.f32.mrf.mxu0
        %v1252 = vadd.f32 0.0, %v1251
        %v1253 = vpop.f32.mrf.mxu0
        %1254 = vmatprep.mubr.f32.mxu0 0.0
        %1255 = vmatmul.mubr.f32.gmra.mxu0 %v1057
        %v1256 = vpop.f32.mrf.mxu0
        %v1257 = vadd.f32 0.0, %v1256
        %v1258 = vpop.f32.mrf.mxu0
        %1259 = vmatprep.mubr.f32.mxu0 0.0
        %1260 = vmatmul.mubr.f32.gmra.mxu0 %v1060
        %v1261 = vpop.f32.mrf.mxu0
        %v1262 = vadd.f32 0.0, %v1261
        %v1263 = vpop.f32.mrf.mxu0
        %1264 = vmatprep.mubr.f32.mxu0 0.0
        %1265 = vmatmul.mubr.f32.gmra.mxu0 %v1063
        %v1266 = vpop.f32.mrf.mxu0
        %v1267 = vadd.f32 0.0, %v1266
        %v1268 = vpop.f32.mrf.mxu0
        %1269 = vmatprep.mubr.f32.mxu0 0.0
        %1270 = vmatmul.mubr.f32.gmra.mxu0 %v1066
        %v1271 = vpop.f32.mrf.mxu0
        %v1272 = vadd.f32 0.0, %v1271
        %v1273 = vpop.f32.mrf.mxu0
        %1274 = vmatprep.mubr.f32.mxu0 0.0
        %1275 = vmatmul.mubr.f32.gmra.mxu0 %v1069
        %v1276 = vpop.f32.mrf.mxu0
        %v1277 = vadd.f32 0.0, %v1276
        %v1278 = vpop.f32.mrf.mxu0
        %1279 = vmatprep.mubr.f32.mxu0 0.0
        %1280 = vmatmul.mubr.f32.gmra.mxu0 %v1072
        %v1281 = vpop.f32.mrf.mxu0
        %v1282 = vadd.f32 0.0, %v1281
        %v1283 = vpop.f32.mrf.mxu0
        %1284 = vmatprep.mubr.f32.mxu0 0.0
        %1285 = vmatmul.mubr.f32.gmra.mxu0 %v1075
        %v1286 = vpop.f32.mrf.mxu0
        %v1287 = vadd.f32 0.0, %v1286
        %v1288 = vpop.f32.mrf.mxu0
        %1289 = vmatprep.mubr.f32.mxu0 0.0
        %1290 = vmatmul.mubr.f32.gmra.mxu0 %v1078
        %v1291 = vpop.f32.mrf.mxu0
        %v1292 = vadd.f32 0.0, %v1291
        %v1293 = vpop.f32.mrf.mxu0
        %1294 = vmatprep.mubr.f32.mxu0 0.0
        %1295 = vmatmul.mubr.f32.gmra.mxu0 %v1081
        %v1296 = vpop.f32.mrf.mxu0
        %v1297 = vadd.f32 0.0, %v1296
        %v1298 = vpop.f32.mrf.mxu0
        %1299 = vmatprep.mubr.f32.mxu0 0.0
        %1300 = vmatmul.mubr.f32.gmra.mxu0 %v1084
        %v1301 = vpop.f32.mrf.mxu0
        %v1302 = vadd.f32 0.0, %v1301
        %v1303 = vpop.f32.mrf.mxu0
        %1304 = vmatprep.mubr.f32.mxu0 0.0
        %1305 = vmatmul.mubr.f32.gmra.mxu0 %v1087
        %v1306 = vpop.f32.mrf.mxu0
        %v1307 = vadd.f32 0.0, %v1306
        %v1308 = vpop.f32.mrf.mxu0
        %1309 = vmatprep.mubr.f32.mxu0 0.0
        %1310 = vmatmul.mubr.f32.gmra.mxu0 %v1090
        %v1311 = vpop.f32.mrf.mxu0
        %v1312 = vadd.f32 0.0, %v1311
        %v1313 = vpop.f32.mrf.mxu0
        %1314 = vmatprep.mubr.f32.mxu0 0.0
        %1315 = vmatmul.mubr.f32.gmra.mxu0 %v1093
        %v1316 = vpop.f32.mrf.mxu0
        %v1317 = vadd.f32 0.0, %v1316
        %v1318 = vpop.f32.mrf.mxu0
        %1319 = vdwg.mxu0
        %v1320 = vadd.f32 %v803, %v1162
        %v1321 = vadd.f32 %v808, %v1167
        %v1322 = vadd.f32 %v813, %v1172
        %v1323 = vadd.f32 %v818, %v1177
        %v1324 = vadd.f32 %v823, %v1182
        %v1325 = vadd.f32 %v828, %v1187
        %v1326 = vadd.f32 %v833, %v1192
        %v1327 = vadd.f32 %v838, %v1197
        %v1328 = vadd.f32 %v843, %v1202
        %v1329 = vadd.f32 %v848, %v1207
        %v1330 = vadd.f32 %v853, %v1212
        %v1331 = vadd.f32 %v858, %v1217
        %v1332 = vadd.f32 %v863, %v1222
        %v1333 = vadd.f32 %v868, %v1227
        %v1334 = vadd.f32 %v873, %v1232
        %v1335 = vadd.f32 %v878, %v1237
        %v1336 = vadd.f32 %v883, %v1242
        %v1337 = vadd.f32 %v888, %v1247
        %v1338 = vadd.f32 %v893, %v1252
        %v1339 = vadd.f32 %v898, %v1257
        %v1340 = vadd.f32 %v903, %v1262
        %v1341 = vadd.f32 %v908, %v1267
        %v1342 = vadd.f32 %v913, %v1272
        %v1343 = vadd.f32 %v918, %v1277
        %v1344 = vadd.f32 %v923, %v1282
        %v1345 = vadd.f32 %v928, %v1287
        %v1346 = vadd.f32 %v933, %v1292
        %v1347 = vadd.f32 %v938, %v1297
        %v1348 = vadd.f32 %v943, %v1302
        %v1349 = vadd.f32 %v948, %v1307
        %v1350 = vadd.f32 %v953, %v1312
        %v1351 = vadd.f32 %v958, %v1317
        %vm1352 = vcmask 64512
        %1353 = vst.msk [vmem:[%s241] sm:$0xff] %vm1352, %v1320
        %1354 = vst.msk [vmem:[%s241 + $0x8] sm:$0xff] %vm1352, %v1321
        %1355 = vst.msk [vmem:[%s241 + $0x10] sm:$0xff] %vm1352, %v1322
        %1356 = vst.msk [vmem:[%s241 + $0x18] sm:$0xff] %vm1352, %v1323
        %1357 = vst.msk [vmem:[%s241 + $0x20] sm:$0xff] %vm1352, %v1324
        %1358 = vst.msk [vmem:[%s241 + $0x28] sm:$0xff] %vm1352, %v1325
        %1359 = vst.msk [vmem:[%s241 + $0x30] sm:$0xff] %vm1352, %v1326
        %1360 = vst.msk [vmem:[%s241 + $0x38] sm:$0xff] %vm1352, %v1327
        %1361 = vst.msk [vmem:[%s241 + $0x40] sm:$0xff] %vm1352, %v1328
        %1362 = vst.msk [vmem:[%s241 + $0x48] sm:$0xff] %vm1352, %v1329
        %1363 = vst.msk [vmem:[%s241 + $0x50] sm:$0xff] %vm1352, %v1330
        %1364 = vst.msk [vmem:[%s241 + $0x58] sm:$0xff] %vm1352, %v1331
        %1365 = vst.msk [vmem:[%s241 + $0x60] sm:$0xff] %vm1352, %v1332
        %1366 = vst.msk [vmem:[%s241 + $0x68] sm:$0xff] %vm1352, %v1333
        %1367 = vst.msk [vmem:[%s241 + $0x70] sm:$0xff] %vm1352, %v1334
        %1368 = vst.msk [vmem:[%s241 + $0x78] sm:$0xff] %vm1352, %v1335
        %1369 = vst.msk [vmem:[%s241 + $0x80] sm:$0xff] %vm1352, %v1336
        %1370 = vst.msk [vmem:[%s241 + $0x88] sm:$0xff] %vm1352, %v1337
        %1371 = vst.msk [vmem:[%s241 + $0x90] sm:$0xff] %vm1352, %v1338
        %1372 = vst.msk [vmem:[%s241 + $0x98] sm:$0xff] %vm1352, %v1339
        %1373 = vst.msk [vmem:[%s241 + $0xa0] sm:$0xff] %vm1352, %v1340
        %1374 = vst.msk [vmem:[%s241 + $0xa8] sm:$0xff] %vm1352, %v1341
        %1375 = vst.msk [vmem:[%s241 + $0xb0] sm:$0xff] %vm1352, %v1342
        %1376 = vst.msk [vmem:[%s241 + $0xb8] sm:$0xff] %vm1352, %v1343
        %1377 = vst.msk [vmem:[%s241 + $0xc0] sm:$0xff] %vm1352, %v1344
        %1378 = vst.msk [vmem:[%s241 + $0xc8] sm:$0xff] %vm1352, %v1345
        %1379 = vst.msk [vmem:[%s241 + $0xd0] sm:$0xff] %vm1352, %v1346
        %1380 = vst.msk [vmem:[%s241 + $0xd8] sm:$0xff] %vm1352, %v1347
        %1381 = vst.msk [vmem:[%s241 + $0xe0] sm:$0xff] %vm1352, %v1348
        %1382 = vst.msk [vmem:[%s241 + $0xe8] sm:$0xff] %vm1352, %v1349
        %1383 = vst.msk [vmem:[%s241 + $0xf0] sm:$0xff] %vm1352, %v1350
        %1384 = vst.msk [vmem:[%s241 + $0xf8] sm:$0xff] %vm1352, %v1351
        %v1385 = vsel %vm1352, %v1320, 0.0
        %v1386 = vsel %vm1352, %v1321, 0.0
        %v1387 = vadd.f32 %v1385, %v1386
        %v1388 = vsel %vm1352, %v1322, 0.0
        %v1389 = vadd.f32 %v1387, %v1388
        %v1390 = vsel %vm1352, %v1323, 0.0
        %v1391 = vadd.f32 %v1389, %v1390
        %v1392 = vsel %vm1352, %v1324, 0.0
        %v1393 = vadd.f32 %v1391, %v1392
        %v1394 = vsel %vm1352, %v1325, 0.0
        %v1395 = vadd.f32 %v1393, %v1394
        %v1396 = vsel %vm1352, %v1326, 0.0
        %v1397 = vadd.f32 %v1395, %v1396
        %v1398 = vsel %vm1352, %v1327, 0.0
        %v1399 = vadd.f32 %v1397, %v1398
        %v1400 = vsel %vm1352, %v1328, 0.0
        %v1401 = vadd.f32 %v1399, %v1400
        %v1402 = vsel %vm1352, %v1329, 0.0
        %v1403 = vadd.f32 %v1401, %v1402
        %v1404 = vsel %vm1352, %v1330, 0.0
        %v1405 = vadd.f32 %v1403, %v1404
        %v1406 = vsel %vm1352, %v1331, 0.0
        %v1407 = vadd.f32 %v1405, %v1406
        %v1408 = vsel %vm1352, %v1332, 0.0
        %v1409 = vadd.f32 %v1407, %v1408
        %v1410 = vsel %vm1352, %v1333, 0.0
        %v1411 = vadd.f32 %v1409, %v1410
        %v1412 = vsel %vm1352, %v1334, 0.0
        %v1413 = vadd.f32 %v1411, %v1412
        %v1414 = vsel %vm1352, %v1335, 0.0
        %v1415 = vadd.f32 %v1413, %v1414
        %v1416 = vsel %vm1352, %v1336, 0.0
        %v1417 = vadd.f32 %v1415, %v1416
        %v1418 = vsel %vm1352, %v1337, 0.0
        %v1419 = vadd.f32 %v1417, %v1418
        %v1420 = vsel %vm1352, %v1338, 0.0
        %v1421 = vadd.f32 %v1419, %v1420
        %v1422 = vsel %vm1352, %v1339, 0.0
        %v1423 = vadd.f32 %v1421, %v1422
        %v1424 = vsel %vm1352, %v1340, 0.0
        %v1425 = vadd.f32 %v1423, %v1424
        %v1426 = vsel %vm1352, %v1341, 0.0
        %v1427 = vadd.f32 %v1425, %v1426
        %v1428 = vsel %vm1352, %v1342, 0.0
        %v1429 = vadd.f32 %v1427, %v1428
        %v1430 = vsel %vm1352, %v1343, 0.0
        %v1431 = vadd.f32 %v1429, %v1430
        %v1432 = vsel %vm1352, %v1344, 0.0
        %v1433 = vadd.f32 %v1431, %v1432
        %v1434 = vsel %vm1352, %v1345, 0.0
        %v1435 = vadd.f32 %v1433, %v1434
        %v1436 = vsel %vm1352, %v1346, 0.0
        %v1437 = vadd.f32 %v1435, %v1436
        %v1438 = vsel %vm1352, %v1347, 0.0
        %v1439 = vadd.f32 %v1437, %v1438
        %v1440 = vsel %vm1352, %v1348, 0.0
        %v1441 = vadd.f32 %v1439, %v1440
        %v1442 = vsel %vm1352, %v1349, 0.0
        %v1443 = vadd.f32 %v1441, %v1442
        %v1444 = vsel %vm1352, %v1350, 0.0
        %v1445 = vadd.f32 %v1443, %v1444
        %v1446 = vsel %vm1352, %v1351, 0.0
        %v1447 = vadd.f32 %v1445, %v1446
        %v1448 = vrot.slane %v1447, 4
        %v1449 = vadd.f32 %v1447, %v1448
        %v1450 = vrot.slane %v1449, 2
        %v1451 = vadd.f32 %v1449, %v1450
        %v1452 = vrot.slane %v1451, 1
        %v1453 = vadd.f32 %v1451, %v1452
        %v1454 = vmul.f32 %v1453, 0.00390625
        %v1455 = vsub.f32 %v1320, %v1454
        %v1456 = vsub.f32 %v1321, %v1454
        %v1457 = vsub.f32 %v1322, %v1454
        %v1458 = vsub.f32 %v1323, %v1454
        %v1459 = vsub.f32 %v1324, %v1454
        %v1460 = vsub.f32 %v1325, %v1454
        %v1461 = vsub.f32 %v1326, %v1454
        %v1462 = vsub.f32 %v1327, %v1454
        %v1463 = vsub.f32 %v1328, %v1454
        %v1464 = vsub.f32 %v1329, %v1454
        %v1465 = vsub.f32 %v1330, %v1454
        %v1466 = vsub.f32 %v1331, %v1454
        %v1467 = vsub.f32 %v1332, %v1454
        %v1468 = vsub.f32 %v1333, %v1454
        %v1469 = vsub.f32 %v1334, %v1454
        %v1470 = vsub.f32 %v1335, %v1454
        %v1471 = vsub.f32 %v1336, %v1454
        %v1472 = vsub.f32 %v1337, %v1454
        %v1473 = vsub.f32 %v1338, %v1454
        %v1474 = vsub.f32 %v1339, %v1454
        %v1475 = vsub.f32 %v1340, %v1454
        %v1476 = vsub.f32 %v1341, %v1454
        %v1477 = vsub.f32 %v1342, %v1454
        %v1478 = vsub.f32 %v1343, %v1454
        %v1479 = vsub.f32 %v1344, %v1454
        %v1480 = vsub.f32 %v1345, %v1454
        %v1481 = vsub.f32 %v1346, %v1454
        %v1482 = vsub.f32 %v1347, %v1454
        %v1483 = vsub.f32 %v1348, %v1454
        %v1484 = vsub.f32 %v1349, %v1454
        %v1485 = vsub.f32 %v1350, %v1454
        %v1486 = vsub.f32 %v1351, %v1454
        %v1487 = vmul.f32 %v1455, %v1455
        %v1488 = vmul.f32 %v1456, %v1456
        %v1489 = vmul.f32 %v1457, %v1457
        %v1490 = vmul.f32 %v1458, %v1458
        %v1491 = vmul.f32 %v1459, %v1459
        %v1492 = vmul.f32 %v1460, %v1460
        %v1493 = vmul.f32 %v1461, %v1461
        %v1494 = vmul.f32 %v1462, %v1462
        %v1495 = vmul.f32 %v1463, %v1463
        %v1496 = vmul.f32 %v1464, %v1464
        %v1497 = vmul.f32 %v1465, %v1465
        %v1498 = vmul.f32 %v1466, %v1466
        %v1499 = vmul.f32 %v1467, %v1467
        %v1500 = vmul.f32 %v1468, %v1468
        %v1501 = vmul.f32 %v1469, %v1469
        %v1502 = vmul.f32 %v1470, %v1470
        %v1503 = vmul.f32 %v1471, %v1471
        %v1504 = vmul.f32 %v1472, %v1472
        %v1505 = vmul.f32 %v1473, %v1473
        %v1506 = vmul.f32 %v1474, %v1474
        %v1507 = vmul.f32 %v1475, %v1475
        %v1508 = vmul.f32 %v1476, %v1476
        %v1509 = vmul.f32 %v1477, %v1477
        %v1510 = vmul.f32 %v1478, %v1478
        %v1511 = vmul.f32 %v1479, %v1479
        %v1512 = vmul.f32 %v1480, %v1480
        %v1513 = vmul.f32 %v1481, %v1481
        %v1514 = vmul.f32 %v1482, %v1482
        %v1515 = vmul.f32 %v1483, %v1483
        %v1516 = vmul.f32 %v1484, %v1484
        %v1517 = vmul.f32 %v1485, %v1485
        %v1518 = vmul.f32 %v1486, %v1486
        %v1519 = vsel %vm1352, %v1487, 0.0
        %v1520 = vsel %vm1352, %v1488, 0.0
        %v1521 = vadd.f32 %v1519, %v1520
        %v1522 = vsel %vm1352, %v1489, 0.0
        %v1523 = vadd.f32 %v1521, %v1522
        %v1524 = vsel %vm1352, %v1490, 0.0
        %v1525 = vadd.f32 %v1523, %v1524
        %v1526 = vsel %vm1352, %v1491, 0.0
        %v1527 = vadd.f32 %v1525, %v1526
        %v1528 = vsel %vm1352, %v1492, 0.0
        %v1529 = vadd.f32 %v1527, %v1528
        %v1530 = vsel %vm1352, %v1493, 0.0
        %v1531 = vadd.f32 %v1529, %v1530
        %v1532 = vsel %vm1352, %v1494, 0.0
        %v1533 = vadd.f32 %v1531, %v1532
        %v1534 = vsel %vm1352, %v1495, 0.0
        %v1535 = vadd.f32 %v1533, %v1534
        %v1536 = vsel %vm1352, %v1496, 0.0
        %v1537 = vadd.f32 %v1535, %v1536
        %v1538 = vsel %vm1352, %v1497, 0.0
        %v1539 = vadd.f32 %v1537, %v1538
        %v1540 = vsel %vm1352, %v1498, 0.0
        %v1541 = vadd.f32 %v1539, %v1540
        %v1542 = vsel %vm1352, %v1499, 0.0
        %v1543 = vadd.f32 %v1541, %v1542
        %v1544 = vsel %vm1352, %v1500, 0.0
        %v1545 = vadd.f32 %v1543, %v1544
        %v1546 = vsel %vm1352, %v1501, 0.0
        %v1547 = vadd.f32 %v1545, %v1546
        %v1548 = vsel %vm1352, %v1502, 0.0
        %v1549 = vadd.f32 %v1547, %v1548
        %v1550 = vsel %vm1352, %v1503, 0.0
        %v1551 = vadd.f32 %v1549, %v1550
        %v1552 = vsel %vm1352, %v1504, 0.0
        %v1553 = vadd.f32 %v1551, %v1552
        %v1554 = vsel %vm1352, %v1505, 0.0
        %v1555 = vadd.f32 %v1553, %v1554
        %v1556 = vsel %vm1352, %v1506, 0.0
        %v1557 = vadd.f32 %v1555, %v1556
        %v1558 = vsel %vm1352, %v1507, 0.0
        %v1559 = vadd.f32 %v1557, %v1558
        %v1560 = vsel %vm1352, %v1508, 0.0
        %v1561 = vadd.f32 %v1559, %v1560
        %v1562 = vsel %vm1352, %v1509, 0.0
        %v1563 = vadd.f32 %v1561, %v1562
        %v1564 = vsel %vm1352, %v1510, 0.0
        %v1565 = vadd.f32 %v1563, %v1564
        %v1566 = vsel %vm1352, %v1511, 0.0
        %v1567 = vadd.f32 %v1565, %v1566
        %v1568 = vsel %vm1352, %v1512, 0.0
        %v1569 = vadd.f32 %v1567, %v1568
        %v1570 = vsel %vm1352, %v1513, 0.0
        %v1571 = vadd.f32 %v1569, %v1570
        %v1572 = vsel %vm1352, %v1514, 0.0
        %v1573 = vadd.f32 %v1571, %v1572
        %v1574 = vsel %vm1352, %v1515, 0.0
        %v1575 = vadd.f32 %v1573, %v1574
        %v1576 = vsel %vm1352, %v1516, 0.0
        %v1577 = vadd.f32 %v1575, %v1576
        %v1578 = vsel %vm1352, %v1517, 0.0
        %v1579 = vadd.f32 %v1577, %v1578
        %v1580 = vsel %vm1352, %v1518, 0.0
        %v1581 = vadd.f32 %v1579, %v1580
        %v1582 = vrot.slane %v1581, 4
        %v1583 = vadd.f32 %v1581, %v1582
        %v1584 = vrot.slane %v1583, 2
        %v1585 = vadd.f32 %v1583, %v1584
        %v1586 = vrot.slane %v1585, 1
        %v1587 = vadd.f32 %v1585, %v1586
        %vm1588 = vcmask 1040384
        %v1589 = vsel %vm1588, %v1453, %v1587
        %vm1590 = vcmask 58368
        %1591 = vst.msk [vmem:[%s219] sm:$0x3] %vm1590, %v1589
        %s1592 = smul.u32 16, %s25
        %p1593 = scmp.lt.s32.totalorder %s23, 1
        %s1594 = scalar_select %p1593, %s23, 1
        %p1595 = scmp.lt.s32.totalorder %s1592, 15
        %s1596 = scalar_select %p1595, %s1592, 15
        %p1597 = scmp.lt.s32.totalorder %s24, 0
        %s1598 = scalar_select %p1597, %s24, 0
        %s1599 = smul.addr %s1596, 2
        %s1600 = sadd.s32 %s1598, %s1599
        %s1601 = smul.addr %s1594, 32
        %s1602 = sadd.s32 %s1600, %s1601
        %s1603 = smul.addr %s1602, 8
        %s1604 = scalar_lea.vmem %s2, %s1603
        %s1605 = sand.u32 %s131, 1
        %s1606 = scalar_lea.sflag [#allocation3], %s1605
        %s1607 = sand.u32 %s131, 1
        %s1608 = smul.addr %s1607, 2
        %s1609 = scalar_lea.vmem [#allocation2], %s1608
        // Predicated region
        $region29: #{tpu_custom_call.1} parent=27 // pred_check
          %p1610 = pneg %p111
        $region30: #{tpu_custom_call.1} parent=27 // pred_check_branch
          %1612 = sbr.rel (%p1610) target = $region32
        $region31: #{tpu_custom_call.1} parent=27 // pred_region
          %s1613 = smul.u32 16, %s25
        $region32: #{tpu_custom_call.1} parent=27 // pred_fallthru
          _
        // Predicated region
        $region33: #{tpu_custom_call.1} parent=27 // pred_check
          %p1614 = pneg %p141
        $region34: #{tpu_custom_call.1} parent=27 // pred_check_branch
          %1616 = sbr.rel (%p1614) target = $region36
        $region35: #{tpu_custom_call.1} parent=27 // pred_region
          %s1618 = ssub.s32 32, 32
          %1619 = vsyncadd %s1606, %s1618
          %s1620 = sadd.s32 %s24, %s25
          %s1621 = sadd.s32 %s1620, %s23
          %s1622 = smul.addr %s1621, 32
          %s1623 = scalar_lea.hbm %s3, %s1622
          %s1625 = sshll.u32 %s1609, 4
          %s1626 = int_to_ptr.vmem [resolvable:$true] %s1625
          %1628 = dma.vmem_to_hbm [thread:$0]  %s1626, 32, %s1623, %s1606
        $region36: #{tpu_custom_call.1} parent=27 // pred_fallthru
          _
      $region28: #{tpu_custom_call.1} parent=5 // pred_fallthru
        _
      %p1629 = scmp.le.s32.totalorder 2, %s13
      // Predicated region
      $region37: #{tpu_custom_call.1} parent=5 // pred_check
        %p1630 = pneg %p1629
      $region38: #{tpu_custom_call.1} parent=5 // pred_check_branch
        %1632 = sbr.rel (%p1630) target = $region40
      $region39: #{tpu_custom_call.1} parent=5 // pred_region
        %s1633 = ssub.s32 %s13, 2
        // Predicated region
        $region41: #{tpu_custom_call.1} parent=39 // pred_check
          %p1634 = pneg %p117
        $region42: #{tpu_custom_call.1} parent=39 // pred_check_branch
          %1636 = sbr.rel (%p1634) target = $region44
        $region43: #{tpu_custom_call.1} parent=39 // pred_region
          %s1637 = smul.u32 16, %s28
          %p1638 = scmp.lt.s32.totalorder %s26, 1
          %s1639 = scalar_select %p1638, %s26, 1
          %p1640 = scmp.lt.s32.totalorder %s1637, 15
          %s1641 = scalar_select %p1640, %s1637, 15
          %p1642 = scmp.lt.s32.totalorder %s27, 0
          %s1643 = scalar_select %p1642, %s27, 0
          %s1644 = smul.addr %s1641, 2
          %s1645 = sadd.s32 %s1643, %s1644
          %s1646 = smul.addr %s1639, 32
          %s1647 = sadd.s32 %s1645, %s1646
          %s1648 = smul.addr %s1647, 8
          %s1649 = scalar_lea.vmem %s2, %s1648
        $region44: #{tpu_custom_call.1} parent=39 // pred_fallthru
          _
        // Predicated region
        $region45: #{tpu_custom_call.1} parent=39 // pred_check
          %p1650 = pneg %p147
        $region46: #{tpu_custom_call.1} parent=39 // pred_check_branch
          %1652 = sbr.rel (%p1650) target = $region48
        $region47: #{tpu_custom_call.1} parent=39 // pred_region
          %s1653 = sand.u32 %s132, 1
          %s1654 = scalar_lea.sflag [#allocation3], %s1653
          %s1655 = sand.u32 %s132, 1
          %s1656 = smul.addr %s1655, 2
          %s1657 = scalar_lea.vmem [#allocation2], %s1656
          %1658 = dma.done %s1654, 32
        $region48: #{tpu_custom_call.1} parent=39 // pred_fallthru
          _
      $region40: #{tpu_custom_call.1} parent=5 // pred_fallthru
        _
    $region6: #{tpu_custom_call.1} parent=1 // loop_footer
      %s17 = sadd.s32 1, %s13
    $region7: #{tpu_custom_call.1} parent=1 // loop_footer_branch
      %12 = sbr.rel target = $region3
    $region8: #{tpu_custom_call.1} parent=1 // loop_exit
      _
    %1659 = vsyncpa [#allocation3], 1
    %s1660 = scalar_lea.sflag [#allocation3], 1
    %1661 = vsyncpa %s1660, 1

</llo_original>
